<compile_context>
chip_gen: v7x
topology: tpu7x:2x2x1
jax: 0.10.0
libtpu: 0.0.40
codegen_flags: <defaults>
</compile_context>

<pallas_src>
import jax
import jax.numpy as jnp
from jax.experimental import pallas as pl
from jax.experimental.pallas import tpu as pltpu


# ----------------------------------------------------------------------------
# Kernels (feature-major: activations are (F, tile_b), weights are (out, in))
# ----------------------------------------------------------------------------
def _grud_kernel_pp(a_ref, h_ref,
                    wd_ref, bd_ref, ws_ref, wh12_ref, woh_ref, bs_ref,
                    out_ref):
    """pp_mode=True. a_ref rows: [x | x_last | x_interval | x_mask | x_last_mask]."""
    IN = a_ref.shape[0] // 5
    H = h_ref.shape[0]
    a = a_ref[...]                       # (5*IN, tb) -- single slab load
    x = a[0 * IN:1 * IN]
    xl = a[1 * IN:2 * IN]
    xi = a[2 * IN:3 * IN]
    xm = a[3 * IN:4 * IN]
    xlm = a[4 * IN:5 * IN]
    h = h_ref[...]                       # (H, tb)

    # Fused decays: [Wid ; Whd] @ xi -> (IN+H, tb), then split.
    d = jnp.dot(wd_ref[...], xi, preferred_element_type=jnp.float32) + bd_ref[...]
    d = jnp.exp(-jnp.maximum(d, 0.0))
    idec = d[:IN] * xlm
    hdec = d[IN:]

    imputation = idec * xl + (1.0 - idec) * x
    x_imp = xm * x + (1.0 - xm) * imputation
    h = hdec * h

    # K-fused gate matmul: columns of ws are [x | x_mask | x_last_mask],
    # rows are [gate1 | gate2 | out_layer].  Operand = [x_imp ; xm ; xlm]
    # (sublane concat of x_imp with the contiguous slab tail -> aligned, cheap).
    gate_in = jnp.concatenate([x_imp, a[3 * IN:]], axis=0)          # (3*IN, tb)
    s = (jnp.dot(ws_ref[...], gate_in, preferred_element_type=jnp.float32)
         + bs_ref[...])                                             # (3H, tb)
    hh = jnp.dot(wh12_ref[...], h, preferred_element_type=jnp.float32)  # (2H, tb)

    g1 = jax.nn.sigmoid(s[:H] + hh[:H])
    g2 = jax.nn.sigmoid(s[H:2 * H] + hh[H:])
    new_h = jnp.tanh(s[2 * H:]
                     + jnp.dot(woh_ref[...], g1 * h,
                               preferred_element_type=jnp.float32))
    out_ref[...] = (1.0 - g2) * h + g2 * new_h                      # lane-dense store


def _grud_kernel_nopp(a_ref, h_ref,
                      wid_ref, bid_ref, whd_ref, bhd_ref,
                      ws_ref, wh12_ref, woh_ref, bs_ref,
                      out_ref):
    """pp_mode=False. a_ref rows: [x | x_last | x_interval | x_mask]."""
    IN = a_ref.shape[0] // 4
    H = h_ref.shape[0]
    a = a_ref[...]                       # (4*IN, tb)
    x = a[0 * IN:1 * IN]
    xl = a[1 * IN:2 * IN]
    xi = a[2 * IN:3 * IN]
    xm = a[3 * IN:4 * IN]
    h = h_ref[...]

    # DiagLinear input decay: xi @ diagflat(w) + b == xi * w + b (pure VPU).
    idec = jnp.exp(-jnp.maximum(xi * wid_ref[...] + bid_ref[...], 0.0))
    imputation = idec * xl + (1.0 - idec) * x
    x_imp = xm * x + (1.0 - xm) * imputation

    hdec = (jnp.dot(whd_ref[...], xi, preferred_element_type=jnp.float32)
            + bhd_ref[...])
    hdec = jnp.exp(-jnp.maximum(hdec, 0.0))
    h = hdec * h

    gate_in = jnp.concatenate([x_imp, a[3 * IN:]], axis=0)          # (2*IN, tb)
    s = (jnp.dot(ws_ref[...], gate_in, preferred_element_type=jnp.float32)
         + bs_ref[...])                                             # (3H, tb)
    hh = jnp.dot(wh12_ref[...], h, preferred_element_type=jnp.float32)  # (2H, tb)

    g1 = jax.nn.sigmoid(s[:H] + hh[:H])
    g2 = jax.nn.sigmoid(s[H:2 * H] + hh[H:])
    new_h = jnp.tanh(s[2 * H:]
                     + jnp.dot(woh_ref[...], g1 * h,
                               preferred_element_type=jnp.float32))
    out_ref[...] = (1.0 - g2) * h + g2 * new_h


# ----------------------------------------------------------------------------
# Wrapper
# ----------------------------------------------------------------------------
def grud_cell(pp_mode, inputs, packed_params, *, tile_b=None):
    """inputs: (x, x_mask, x_last, x_last_mask, x_interval, h) in (B, F) layout;
       packed_params: output of pack_params().  Returns (B, H)."""
    x, xm, xl, xlm, xi, h = inputs
    B, IN = x.shape
    H = h.shape[1]

    # Feature-major slab: one DMA stream per grid step instead of 5-6.
    if pp_mode:
        slab = jnp.concatenate([x.T, xl.T, xi.T, xm.T, xlm.T], axis=0)  # (5*IN, B)
        kernel = _grud_kernel_pp
        n_feat = 5
    else:
        slab = jnp.concatenate([x.T, xl.T, xi.T, xm.T], axis=0)         # (4*IN, B)
        kernel = _grud_kernel_nopp
        n_feat = 4
    h_fm = h.T                                                          # (H, B)

    weights = list(packed_params)
    w_bytes = sum(int(w.size) * w.dtype.itemsize for w in weights)

    # --- tile_b sizing ------------------------------------------------------
    LANE = 128
    VMEM_BUDGET = 24 * 1024 * 1024        # stay well under v7x's 32 MiB scoped VMEM
    bytes_per_col = 4 * (n_feat * IN + 2 * H)   # slab + h + out per batch column, f32

    def footprint(tb):
        # activation tiles double-buffered by the BlockSpec pipeline; weights
        # are small and (conservatively) counted double-buffered too.
        return 2 * bytes_per_col * tb + 2 * w_bytes

    if tile_b is None:
        tile_b = 4096                     # big tiles: fewer ~0.35us steps on 1-TC chips
    tile_b = min(tile_b, B)
    while tile_b > LANE and footprint(tile_b) > VMEM_BUDGET:
        tile_b //= 2
    # v7x megacore: keep >= 2 grid steps when B is large enough so both
    # TensorCores get work (no-op cost on single-TC v5e/v6e).
    if B >= 2 * LANE and tile_b > pl.cdiv(B, 2):
        tile_b = pl.cdiv(B, 2)

    if tile_b >= B or B <= LANE:
        tile_b = B                        # single block: block shape == full dims is legal
        B_pad = B
    else:
        tile_b = max(LANE, (tile_b // LANE) * LANE)   # lane-dense tiles
        B_pad = pl.cdiv(B, tile_b) * tile_b           # pad instead of ragged / oversized tile

    if B_pad != B:
        pad = ((0, 0), (0, B_pad - B))
        slab = jnp.pad(slab, pad)
        h_fm = jnp.pad(h_fm, pad)

    grid = (B_pad // tile_b,)
    F = slab.shape[0]

    act_specs = [pl.BlockSpec((F, tile_b), lambda i: (0, i)),
                 pl.BlockSpec((H, tile_b), lambda i: (0, i))]
    # Constant index_map -> weights fetched once, VMEM-resident across steps.
    w_specs = [pl.BlockSpec(w.shape, lambda i: (0, 0)) for w in weights]

    out_fm = pl.pallas_call(
        kernel,
        out_shape=jax.ShapeDtypeStruct((H, B_pad), jnp.float32),
        grid=grid,
        in_specs=act_specs + w_specs,
        out_specs=pl.BlockSpec((H, tile_b), lambda i: (0, i)),
        compiler_params=pltpu.CompilerParams(
            dimension_semantics=("parallel",),
            vmem_limit_bytes=32 * 1024 * 1024),
    )(slab, h_fm, *weights)

    return out_fm[:, :B].T


# ----------------------------------------------------------------------------
# Parameter construction (torch-layout: W is (out, in), b is (out,)) + packing
# ----------------------------------------------------------------------------
def _linear(key, in_f, out_f):
    k = 1.0 / (in_f ** 0.5)
    kw, kb = jax.random.split(key)
    W = jax.random.uniform(kw, (out_f, in_f), jnp.float32, -k, k)
    b = jax.random.uniform(kb, (out_f,), jnp.float32, -k, k)
    return W, b


def make_params(key, in_size, hidden_size, pp_mode):
    keys = jax.random.split(key, 5)
    p = {}
    if pp_mode:
        gate_size = 3 * in_size + hidden_size
        p['wid'], p['bid'] = _linear(keys[0], in_size, in_size)     # Linear(IN, IN)
    else:
        gate_size = 2 * in_size + hidden_size
        kw, kb = jax.random.split(keys[0])
        p['wid'] = jax.random.uniform(kw, (in_size,), jnp.float32, -1e-4, 1e-4)
        p['bid'] = jax.random.uniform(kb, (in_size,), jnp.float32, -1e-4, 1e-4)
    p['whd'], p['bhd'] = _linear(keys[1], in_size, hidden_size)
    p['W1'], p['b1'] = _linear(keys[2], gate_size, hidden_size)
    p['W2'], p['b2'] = _linear(keys[3], gate_size, hidden_size)
    p['Wo'], p['bo'] = _linear(keys[4], gate_size, hidden_size)
    return p


def pack_params(p, in_size, hidden_size, pp_mode):
    """Pack torch-layout params into K/N-fused, feature-major stacks."""
    IN, H = in_size, hidden_size

    def split_cols(W):
        # gate_x concat column order: [x(IN), h(H), x_mask(IN), (x_last_mask(IN))]
        wx = W[:, :IN]
        wh = W[:, IN:IN + H]
        wm = W[:, IN + H:2 * IN + H]
        wlm = W[:, 2 * IN + H:] if pp_mode else None
        return wx, wh, wm, wlm

    w1x, w1h, w1m, w1lm = split_cols(p['W1'])
    w2x, w2h, w2m, w2lm = split_cols(p['W2'])
    wox, woh, wom, wolm = split_cols(p['Wo'])

    if pp_mode:
        ws = jnp.concatenate([
            jnp.concatenate([w1x, w1m, w1lm], axis=1),
            jnp.concatenate([w2x, w2m, w2lm], axis=1),
            jnp.concatenate([wox, wom, wolm], axis=1)], axis=0)      # (3H, 3*IN)
    else:
        ws = jnp.concatenate([
            jnp.concatenate([w1x, w1m], axis=1),
            jnp.concatenate([w2x, w2m], axis=1),
            jnp.concatenate([wox, wom], axis=1)], axis=0)            # (3H, 2*IN)

    wh12 = jnp.concatenate([w1h, w2h], axis=0)                       # (2H, H)
    bs = jnp.concatenate([p['b1'], p['b2'], p['bo']]).reshape(3 * H, 1)

    if pp_mode:
        wd = jnp.concatenate([p['wid'], p['whd']], axis=0)           # (IN+H, IN)
        bd = jnp.concatenate([p['bid'], p['bhd']]).reshape(IN + H, 1)
        return [wd, bd, ws, wh12, woh, bs]
    return [p['wid'].reshape(IN, 1), p['bid'].reshape(IN, 1),
            p['whd'], p['bhd'].reshape(H, 1),
            ws, wh12, woh, bs]


# ----------------------------------------------------------------------------
# Pure-JAX reference (mirrors the PyTorch forward exactly, uses raw params)
# ----------------------------------------------------------------------------
def grud_ref(pp_mode, inputs, p):
    x, xm, xl, xlm, xi, h = inputs
    if pp_mode:
        idec = xi @ p['wid'].T + p['bid']
    else:
        idec = xi * p['wid'] + p['bid']
    idec = jnp.exp(-jnp.maximum(idec, 0.0))
    if pp_mode:
        idec = idec * xlm
    imputation = idec * xl + (1.0 - idec) * x
    x = xm * x + (1.0 - xm) * imputation
    hdec = jnp.exp(-jnp.maximum(xi @ p['whd'].T + p['bhd'], 0.0))
    h = hdec * h
    if pp_mode:
        gate_x = jnp.concatenate([x, h, xm, xlm], axis=1)
    else:
        gate_x = jnp.concatenate([x, h, xm], axis=1)
    g1 = jax.nn.sigmoid(gate_x @ p['W1'].T + p['b1'])
    g2 = jax.nn.sigmoid(gate_x @ p['W2'].T + p['b2'])
    if pp_mode:
        xcat = jnp.concatenate([x, g1 * h, xm, xlm], axis=1)
    else:
        xcat = jnp.concatenate([x, g1 * h, xm], axis=1)
    new_h = jnp.tanh(xcat @ p['Wo'].T + p['bo'])
    return (1.0 - g2) * h + g2 * new_h


# ----------------------------------------------------------------------------
if __name__ == "__main__":
    B, IN, H = 256, 16, 32            # B=256 -> tile_b=128, 2-step pipelined grid
    key = jax.random.PRNGKey(0)
    k_in, k_pp, k_nopp = jax.random.split(key, 3)
    ks = jax.random.split(k_in, 6)

    x = jax.random.normal(ks[0], (B, IN), jnp.float32)
    x_mask = (jax.random.uniform(ks[1], (B, IN)) > 0.5).astype(jnp.float32)
    x_last = jax.random.normal(ks[2], (B, IN), jnp.float32)
    x_last_mask = (jax.random.uniform(ks[3], (B, IN)) > 0.5).astype(jnp.float32)
    x_interval = jax.random.uniform(ks[4], (B, IN), jnp.float32, 0.0, 3.0)
    h = jax.random.normal(ks[5], (B, H), jnp.float32)
    inputs = (x, x_mask, x_last, x_last_mask, x_interval, h)

    ok = True
    for pp_mode, pkey in [(True, k_pp), (False, k_nopp)]:
        params = make_params(pkey, IN, H, pp_mode)
        packed = pack_params(params, IN, H, pp_mode)
        out = grud_cell(pp_mode, inputs, packed)
        out = jax.block_until_ready(out)
        ref = grud_ref(pp_mode, inputs, params)
        if not jnp.allclose(out, ref, atol=1e-4, rtol=1e-4):
            ok = False
            print(f"MISMATCH pp_mode={pp_mode}: "
                  f"max err {float(jnp.max(jnp.abs(out - ref)))}")

    if ok:
        print("KERNEL_OK")
</pallas_src>

<mosaic_0001>
module attributes {stable_mosaic.version = 11 : i64} {
  func.func @_grud_kernel_pp(%arg0: i32, %arg1: memref<80x128xf32, #tpu.memory_space<vmem>>, %arg2: memref<32x128xf32, #tpu.memory_space<vmem>>, %arg3: memref<48x16xf32, #tpu.memory_space<vmem>>, %arg4: memref<48x1xf32, #tpu.memory_space<vmem>>, %arg5: memref<96x48xf32, #tpu.memory_space<vmem>>, %arg6: memref<64x32xf32, #tpu.memory_space<vmem>>, %arg7: memref<32x32xf32, #tpu.memory_space<vmem>>, %arg8: memref<96x1xf32, #tpu.memory_space<vmem>>, %arg9: memref<32x128xf32, #tpu.memory_space<vmem>>) attributes {dimension_semantics = [#tpu.dimension_semantics<parallel>], iteration_bounds = array<i64: 2>, scalar_prefetch = 0 : i64, scratch_operands = 0 : i64, tpu.core_type = #tpu.core_type<tc>, window_params = [{transform_indices = @transform_0, window_bounds = array<i64: 80, 128>}, {transform_indices = @transform_1, window_bounds = array<i64: 32, 128>}, {pipeline_mode = #tpu.pipeline_mode<synchronous>, transform_indices = @transform_2, window_bounds = array<i64: 48, 16>}, {pipeline_mode = #tpu.pipeline_mode<synchronous>, transform_indices = @transform_3, window_bounds = array<i64: 48, 1>}, {pipeline_mode = #tpu.pipeline_mode<synchronous>, transform_indices = @transform_4, window_bounds = array<i64: 96, 48>}, {pipeline_mode = #tpu.pipeline_mode<synchronous>, transform_indices = @transform_5, window_bounds = array<i64: 64, 32>}, {pipeline_mode = #tpu.pipeline_mode<synchronous>, transform_indices = @transform_6, window_bounds = array<i64: 32, 32>}, {pipeline_mode = #tpu.pipeline_mode<synchronous>, transform_indices = @transform_7, window_bounds = array<i64: 96, 1>}, {transform_indices = @transform_8, window_bounds = array<i64: 32, 128>}]} {
    %c0 = arith.constant 0 : index
    %c0_0 = arith.constant 0 : index
    %0 = vector.load %arg1[%c0, %c0_0] : memref<80x128xf32, #tpu.memory_space<vmem>>, vector<80x128xf32>
    %1 = vector.extract_strided_slice %0 {offsets = [0, 0], sizes = [16, 128], strides = [1, 1]} : vector<80x128xf32> to vector<16x128xf32>
    %2 = vector.extract_strided_slice %0 {offsets = [16, 0], sizes = [16, 128], strides = [1, 1]} : vector<80x128xf32> to vector<16x128xf32>
    %3 = vector.extract_strided_slice %0 {offsets = [32, 0], sizes = [16, 128], strides = [1, 1]} : vector<80x128xf32> to vector<16x128xf32>
    %4 = vector.extract_strided_slice %0 {offsets = [48, 0], sizes = [16, 128], strides = [1, 1]} : vector<80x128xf32> to vector<16x128xf32>
    %5 = vector.extract_strided_slice %0 {offsets = [64, 0], sizes = [16, 128], strides = [1, 1]} : vector<80x128xf32> to vector<16x128xf32>
    %c0_1 = arith.constant 0 : index
    %c0_2 = arith.constant 0 : index
    %6 = vector.load %arg2[%c0_1, %c0_2] : memref<32x128xf32, #tpu.memory_space<vmem>>, vector<32x128xf32>
    %c0_3 = arith.constant 0 : index
    %c0_4 = arith.constant 0 : index
    %7 = vector.load %arg3[%c0_3, %c0_4] : memref<48x16xf32, #tpu.memory_space<vmem>>, vector<48x16xf32>
    %cst = arith.constant dense<0.000000e+00> : vector<48x128xf32>
    %8 = tpu.matmul %7, %3, %cst {dimension_numbers = #tpu.dot_dimension_numbers<[1], [0], [0], [1], [0, 0, 1, 1], [], []>} : vector<48x16xf32>, vector<16x128xf32>, vector<48x128xf32> -> vector<48x128xf32>
    %c0_5 = arith.constant 0 : index
    %c0_6 = arith.constant 0 : index
    %9 = vector.load %arg4[%c0_5, %c0_6] : memref<48x1xf32, #tpu.memory_space<vmem>>, vector<48x1xf32>
    %10 = vector.broadcast %9 : vector<48x1xf32> to vector<48x128xf32>
    %11 = arith.addf %8, %10 : vector<48x128xf32>
    %cst_7 = arith.constant 0.000000e+00 : f32
    %12 = vector.broadcast %cst_7 : f32 to vector<48x128xf32>
    %13 = arith.maximumf %11, %12 : vector<48x128xf32>
    %cst_8 = arith.constant 0.000000e+00 : f32
    %14 = vector.broadcast %cst_8 : f32 to vector<48x128xf32>
    %15 = arith.subf %14, %13 : vector<48x128xf32>
    %16 = math.exp %15 : vector<48x128xf32>
    %17 = vector.extract_strided_slice %16 {offsets = [0, 0], sizes = [16, 128], strides = [1, 1]} : vector<48x128xf32> to vector<16x128xf32>
    %18 = arith.mulf %17, %5 : vector<16x128xf32>
    %19 = vector.extract_strided_slice %16 {offsets = [16, 0], sizes = [32, 128], strides = [1, 1]} : vector<48x128xf32> to vector<32x128xf32>
    %20 = arith.mulf %18, %2 : vector<16x128xf32>
    %cst_9 = arith.constant 1.000000e+00 : f32
    %21 = vector.broadcast %cst_9 : f32 to vector<16x128xf32>
    %22 = arith.subf %21, %18 : vector<16x128xf32>
    %23 = arith.mulf %22, %1 : vector<16x128xf32>
    %24 = arith.addf %20, %23 : vector<16x128xf32>
    %25 = arith.mulf %4, %1 : vector<16x128xf32>
    %cst_10 = arith.constant 1.000000e+00 : f32
    %26 = vector.broadcast %cst_10 : f32 to vector<16x128xf32>
    %27 = arith.subf %26, %4 : vector<16x128xf32>
    %28 = arith.mulf %27, %24 : vector<16x128xf32>
    %29 = arith.addf %25, %28 : vector<16x128xf32>
    %30 = arith.mulf %19, %6 : vector<32x128xf32>
    %31 = vector.extract_strided_slice %0 {offsets = [48, 0], sizes = [32, 128], strides = [1, 1]} : vector<80x128xf32> to vector<32x128xf32>
    %32 = tpu.concatenate %29, %31 in 0 : vector<16x128xf32>, vector<32x128xf32> -> vector<48x128xf32>
    %c0_11 = arith.constant 0 : index
    %c0_12 = arith.constant 0 : index
    %33 = vector.load %arg5[%c0_11, %c0_12] : memref<96x48xf32, #tpu.memory_space<vmem>>, vector<96x48xf32>
    %cst_13 = arith.constant dense<0.000000e+00> : vector<96x128xf32>
    %34 = tpu.matmul %33, %32, %cst_13 {dimension_numbers = #tpu.dot_dimension_numbers<[1], [0], [0], [1], [0, 0, 1, 1], [], []>} : vector<96x48xf32>, vector<48x128xf32>, vector<96x128xf32> -> vector<96x128xf32>
    %c0_14 = arith.constant 0 : index
    %c0_15 = arith.constant 0 : index
    %35 = vector.load %arg8[%c0_14, %c0_15] : memref<96x1xf32, #tpu.memory_space<vmem>>, vector<96x1xf32>
    %36 = vector.broadcast %35 : vector<96x1xf32> to vector<96x128xf32>
    %37 = arith.addf %34, %36 : vector<96x128xf32>
    %c0_16 = arith.constant 0 : index
    %c0_17 = arith.constant 0 : index
    %38 = vector.load %arg6[%c0_16, %c0_17] : memref<64x32xf32, #tpu.memory_space<vmem>>, vector<64x32xf32>
    %cst_18 = arith.constant dense<0.000000e+00> : vector<64x128xf32>
    %39 = tpu.matmul %38, %30, %cst_18 {dimension_numbers = #tpu.dot_dimension_numbers<[1], [0], [0], [1], [0, 0, 1, 1], [], []>} : vector<64x32xf32>, vector<32x128xf32>, vector<64x128xf32> -> vector<64x128xf32>
    %40 = vector.extract_strided_slice %37 {offsets = [0, 0], sizes = [32, 128], strides = [1, 1]} : vector<96x128xf32> to vector<32x128xf32>
    %41 = vector.extract_strided_slice %39 {offsets = [0, 0], sizes = [32, 128], strides = [1, 1]} : vector<64x128xf32> to vector<32x128xf32>
    %42 = arith.addf %40, %41 : vector<32x128xf32>
    %43 = arith.negf %42 : vector<32x128xf32>
    %44 = math.exp %43 : vector<32x128xf32>
    %cst_19 = arith.constant 1.000000e+00 : f32
    %45 = vector.broadcast %cst_19 : f32 to vector<32x128xf32>
    %46 = arith.addf %45, %44 : vector<32x128xf32>
    %47 = arith.divf %45, %46 : vector<32x128xf32>
    %48 = vector.extract_strided_slice %37 {offsets = [32, 0], sizes = [32, 128], strides = [1, 1]} : vector<96x128xf32> to vector<32x128xf32>
    %49 = vector.extract_strided_slice %39 {offsets = [32, 0], sizes = [32, 128], strides = [1, 1]} : vector<64x128xf32> to vector<32x128xf32>
    %50 = arith.addf %48, %49 : vector<32x128xf32>
    %51 = arith.negf %50 : vector<32x128xf32>
    %52 = math.exp %51 : vector<32x128xf32>
    %cst_20 = arith.constant 1.000000e+00 : f32
    %53 = vector.broadcast %cst_20 : f32 to vector<32x128xf32>
    %54 = arith.addf %53, %52 : vector<32x128xf32>
    %55 = arith.divf %53, %54 : vector<32x128xf32>
    %56 = vector.extract_strided_slice %37 {offsets = [64, 0], sizes = [32, 128], strides = [1, 1]} : vector<96x128xf32> to vector<32x128xf32>
    %c0_21 = arith.constant 0 : index
    %c0_22 = arith.constant 0 : index
    %57 = vector.load %arg7[%c0_21, %c0_22] : memref<32x32xf32, #tpu.memory_space<vmem>>, vector<32x32xf32>
    %58 = arith.mulf %47, %30 : vector<32x128xf32>
    %cst_23 = arith.constant dense<0.000000e+00> : vector<32x128xf32>
    %59 = tpu.matmul %57, %58, %cst_23 {dimension_numbers = #tpu.dot_dimension_numbers<[1], [0], [0], [1], [0, 0, 1, 1], [], []>} : vector<32x32xf32>, vector<32x128xf32>, vector<32x128xf32> -> vector<32x128xf32>
    %60 = arith.addf %56, %59 : vector<32x128xf32>
    %61 = math.tanh %60 : vector<32x128xf32>
    %cst_24 = arith.constant 1.000000e+00 : f32
    %62 = vector.broadcast %cst_24 : f32 to vector<32x128xf32>
    %63 = arith.subf %62, %55 : vector<32x128xf32>
    %64 = arith.mulf %63, %30 : vector<32x128xf32>
    %65 = arith.mulf %55, %61 : vector<32x128xf32>
    %66 = arith.addf %64, %65 : vector<32x128xf32>
    %c0_25 = arith.constant 0 : index
    %c0_26 = arith.constant 0 : index
    %67 = vector.load %arg9[%c0_25, %c0_26] : memref<32x128xf32, #tpu.memory_space<vmem>>, vector<32x128xf32>
    tpu.vector_store %arg9[%c0_25, %c0_26], %66 {strides = array<i32>} : memref<32x128xf32, #tpu.memory_space<vmem>>, vector<32x128xf32>,
    return
  }
  func.func @transform_0(%arg0: i32) -> (i32, i32) {
    %c0_i32 = arith.constant 0 : i32
    %c0_i32_0 = arith.constant 0 : i32
    return %c0_i32, %arg0 : i32, i32
  }
  func.func @transform_1(%arg0: i32) -> (i32, i32) {
    %c0_i32 = arith.constant 0 : i32
    %c0_i32_0 = arith.constant 0 : i32
    return %c0_i32, %arg0 : i32, i32
  }
  func.func @transform_2(%arg0: i32) -> (i32, i32) {
    %c0_i32 = arith.constant 0 : i32
    %c0_i32_0 = arith.constant 0 : i32
    %c0_i32_1 = arith.constant 0 : i32
    return %c0_i32, %c0_i32_0 : i32, i32
  }
  func.func @transform_3(%arg0: i32) -> (i32, i32) {
    %c0_i32 = arith.constant 0 : i32
    %c0_i32_0 = arith.constant 0 : i32
    %c0_i32_1 = arith.constant 0 : i32
    return %c0_i32, %c0_i32_0 : i32, i32
  }
  func.func @transform_4(%arg0: i32) -> (i32, i32) {
    %c0_i32 = arith.constant 0 : i32
    %c0_i32_0 = arith.constant 0 : i32
    %c0_i32_1 = arith.constant 0 : i32
    return %c0_i32, %c0_i32_0 : i32, i32
  }
  func.func @transform_5(%arg0: i32) -> (i32, i32) {
    %c0_i32 = arith.constant 0 : i32
    %c0_i32_0 = arith.constant 0 : i32
    %c0_i32_1 = arith.constant 0 : i32
    return %c0_i32, %c0_i32_0 : i32, i32
  }
  func.func @transform_6(%arg0: i32) -> (i32, i32) {
    %c0_i32 = arith.constant 0 : i32
    %c0_i32_0 = arith.constant 0 : i32
    %c0_i32_1 = arith.constant 0 : i32
    return %c0_i32, %c0_i32_0 : i32, i32
  }
  func.func @transform_7(%arg0: i32) -> (i32, i32) {
    %c0_i32 = arith.constant 0 : i32
    %c0_i32_0 = arith.constant 0 : i32
    %c0_i32_1 = arith.constant 0 : i32
    return %c0_i32, %c0_i32_0 : i32, i32
  }
  func.func @transform_8(%arg0: i32) -> (i32, i32) {
    %c0_i32 = arith.constant 0 : i32
    %c0_i32_0 = arith.constant 0 : i32
    return %c0_i32, %arg0 : i32, i32
  }
}

</mosaic_0001>

<llo_original>
// kernel: tpu_custom_call.1
$region0: #{tpu_custom_call.1}
  #allocation0 [shape = 'u32[]', space=smem, size = 0x4, offset = 0x4, fixed_abs, tag = 'smem constant byte address 0x4 - core index']
  #allocation1 [shape = 'u32[144,128]{1,0:T(1,128)}', space=vmem, size = 0x12000, scoped, tag = 'internal scratch']
  %s0 = inlined_call_operand.vmem [shape: f32[80,256], index: 0, kind: input, shape index: {}]
  %s1 = inlined_call_operand.vmem [shape: f32[32,256], index: 1, kind: input, shape index: {}]
  %s2 = inlined_call_operand.vmem [shape: f32[48,16], index: 2, kind: input, shape index: {}]
  %s3 = inlined_call_operand.vmem [shape: f32[48,1], index: 3, kind: input, shape index: {}]
  %s4 = inlined_call_operand.vmem [shape: f32[96,48], index: 4, kind: input, shape index: {}]
  %s5 = inlined_call_operand.vmem [shape: f32[64,32], index: 5, kind: input, shape index: {}]
  %s6 = inlined_call_operand.vmem [shape: f32[32,32], index: 6, kind: input, shape index: {}]
  %s7 = inlined_call_operand.vmem [shape: f32[96,1], index: 7, kind: input, shape index: {}]
  %s8 = inlined_call_operand.hbm [shape: f32[32,256], index: 8, kind: output, shape index: {}]
  %s9 = sld [smem:[#allocation0]]
  $region141: #{tpu_custom_call.1} parent=0
    _
  %s11 = ssub.s32 1, %s9
  %s12 = scalar_select 0, %s11, %s9
  $region1: #{tpu_custom_call.1} parent=0
    #allocation2 [shape = 'u8[81920]{0}', space=vmem, size = 0x14000, scoped, tag = 'input window, operand 0']
    #allocation3 [shape = 'u8[32768]{0}', space=vmem, size = 0x8000, scoped, tag = 'input window, operand 1']
    #allocation4 [shape = 'u8[32768]{0}', space=vmem, size = 0x8000, scoped, tag = 'output window, operand 0']
    #allocation5 [shape = 's32[2]{0}', space=sflag, size = 0x8, scoped, tag = 'scoped memory for tpu_custom_call.1']
    %13 = vsyncpa [#allocation5], 0
    %s14 = scalar_lea.sflag [#allocation5], 1
    %15 = vsyncpa %s14, 0
    loop: start=0, step=1, limit=4
    $region2: #{tpu_custom_call.1} parent=1 // loop_pre_header
      _
    $region3: #{tpu_custom_call.1} parent=1 // loop_header
      %s17 = sphi 0, %s21
      %p18 = scmp.ge.s32.totalorder %s17, 4
      %s27 = sphi 0, %s29
      %s30 = sphi 0, %s27
      %s31 = sphi 0, %s30
      %s47 = sphi 0, %s31
      %s53 = sphi 0, %s55
      %s56 = sphi 0, %s53
      %s57 = sphi 0, %s56
      %s73 = sphi 0, %s57
      %s77 = sphi 0, %s77
      %s79 = sphi 0, %s77
      %s80 = sphi 0, %s79
      %s94 = sphi 0, %s80
      %s98 = sphi 0, %s98
      %s100 = sphi 0, %s98
      %s101 = sphi 0, %s100
      %s115 = sphi 0, %s101
      %s119 = sphi 0, %s119
      %s121 = sphi 0, %s119
      %s122 = sphi 0, %s121
      %s136 = sphi 0, %s122
      %s140 = sphi 0, %s140
      %s142 = sphi 0, %s140
      %s143 = sphi 0, %s142
      %s157 = sphi 0, %s143
      %s161 = sphi 0, %s161
      %s163 = sphi 0, %s161
      %s164 = sphi 0, %s163
      %s178 = sphi 0, %s164
      %s182 = sphi 0, %s182
      %s184 = sphi 0, %s182
      %s185 = sphi 0, %s184
      %s199 = sphi 0, %s185
      %s205 = sphi 0, %s207
      %s208 = sphi 0, %s205
      %s209 = sphi 0, %s208
      %s225 = sphi 0, %s209
    $region4: #{tpu_custom_call.1} parent=1 // loop_header_branch
      %20 = sbr.rel (%p18) target = $region8
    $region5: #{tpu_custom_call.1} parent=1 // loop_body
      %s22 = ssub.s32 %s17, 1
      %s23 = ssub.s32 %s17, 2
      %s24 = sadd.s32 %s17, 1
      %s25 = ssub.s32 %s17, %s24
      %p26 = scmp.eq.s32.totalorder %s25, 0
      %s28 = sadd.s32 %s27, 1
      %s29 = scalar_select %p26, %s27, %s28
      %p32 = pneg %p26
      %p33 = scmp.eq.s32.totalorder %s17, 1
      %p34 = por %p32, %p33
      %p35 = scmp.ne.s32.totalorder %s27, %s30
      %p36 = scmp.eq.s32.totalorder %s17, 0
      %p37 = por %p35, %p36
      %p38 = scmp.ne.s32.totalorder %s27, %s30
      %p39 = scmp.eq.s32.totalorder %s22, 1
      %p40 = por %p38, %p39
      %p41 = scmp.ne.s32.totalorder %s30, %s31
      %p42 = scmp.eq.s32.totalorder %s22, 0
      %p43 = por %p41, %p42
      %p44 = scmp.ne.s32.totalorder %s30, %s31
      %p45 = scmp.eq.s32.totalorder %s23, 1
      %p46 = por %p44, %p45
      %p48 = scmp.ne.s32.totalorder %s31, %s47
      %p49 = scmp.eq.s32.totalorder %s23, 0
      %p50 = por %p48, %p49
      %s51 = ssub.s32 %s17, %s24
      %p52 = scmp.eq.s32.totalorder %s51, 0
      %s54 = sadd.s32 %s53, 1
      %s55 = scalar_select %p52, %s53, %s54
      %p58 = pneg %p52
      %p59 = scmp.eq.s32.totalorder %s17, 1
      %p60 = por %p58, %p59
      %p61 = scmp.ne.s32.totalorder %s53, %s56
      %p62 = scmp.eq.s32.totalorder %s17, 0
      %p63 = por %p61, %p62
      %p64 = scmp.ne.s32.totalorder %s53, %s56
      %p65 = scmp.eq.s32.totalorder %s22, 1
      %p66 = por %p64, %p65
      %p67 = scmp.ne.s32.totalorder %s56, %s57
      %p68 = scmp.eq.s32.totalorder %s22, 0
      %p69 = por %p67, %p68
      %p70 = scmp.ne.s32.totalorder %s56, %s57
      %p71 = scmp.eq.s32.totalorder %s23, 1
      %p72 = por %p70, %p71
      %p74 = scmp.ne.s32.totalorder %s57, %s73
      %p75 = scmp.eq.s32.totalorder %s23, 0
      %p76 = por %p74, %p75
      %s78 = sadd.s32 %s77, 1
      %p81 = scmp.eq.s32.totalorder %s17, 1
      %p82 = scmp.ne.s32.totalorder %s77, %s79
      %p83 = scmp.eq.s32.totalorder %s17, 0
      %p84 = por %p82, %p83
      %p85 = scmp.ne.s32.totalorder %s77, %s79
      %p86 = scmp.eq.s32.totalorder %s22, 1
      %p87 = por %p85, %p86
      %p88 = scmp.ne.s32.totalorder %s79, %s80
      %p89 = scmp.eq.s32.totalorder %s22, 0
      %p90 = por %p88, %p89
      %p91 = scmp.ne.s32.totalorder %s79, %s80
      %p92 = scmp.eq.s32.totalorder %s23, 1
      %p93 = por %p91, %p92
      %p95 = scmp.ne.s32.totalorder %s80, %s94
      %p96 = scmp.eq.s32.totalorder %s23, 0
      %p97 = por %p95, %p96
      %s99 = sadd.s32 %s98, 1
      %p102 = scmp.eq.s32.totalorder %s17, 1
      %p103 = scmp.ne.s32.totalorder %s98, %s100
      %p104 = scmp.eq.s32.totalorder %s17, 0
      %p105 = por %p103, %p104
      %p106 = scmp.ne.s32.totalorder %s98, %s100
      %p107 = scmp.eq.s32.totalorder %s22, 1
      %p108 = por %p106, %p107
      %p109 = scmp.ne.s32.totalorder %s100, %s101
      %p110 = scmp.eq.s32.totalorder %s22, 0
      %p111 = por %p109, %p110
      %p112 = scmp.ne.s32.totalorder %s100, %s101
      %p113 = scmp.eq.s32.totalorder %s23, 1
      %p114 = por %p112, %p113
      %p116 = scmp.ne.s32.totalorder %s101, %s115
      %p117 = scmp.eq.s32.totalorder %s23, 0
      %p118 = por %p116, %p117
      %s120 = sadd.s32 %s119, 1
      %p123 = scmp.eq.s32.totalorder %s17, 1
      %p124 = scmp.ne.s32.totalorder %s119, %s121
      %p125 = scmp.eq.s32.totalorder %s17, 0
      %p126 = por %p124, %p125
      %p127 = scmp.ne.s32.totalorder %s119, %s121
      %p128 = scmp.eq.s32.totalorder %s22, 1
      %p129 = por %p127, %p128
      %p130 = scmp.ne.s32.totalorder %s121, %s122
      %p131 = scmp.eq.s32.totalorder %s22, 0
      %p132 = por %p130, %p131
      %p133 = scmp.ne.s32.totalorder %s121, %s122
      %p134 = scmp.eq.s32.totalorder %s23, 1
      %p135 = por %p133, %p134
      %p137 = scmp.ne.s32.totalorder %s122, %s136
      %p138 = scmp.eq.s32.totalorder %s23, 0
      %p139 = por %p137, %p138
      %s141 = sadd.s32 %s140, 1
      %p144 = scmp.eq.s32.totalorder %s17, 1
      %p145 = scmp.ne.s32.totalorder %s140, %s142
      %p146 = scmp.eq.s32.totalorder %s17, 0
      %p147 = por %p145, %p146
      %p148 = scmp.ne.s32.totalorder %s140, %s142
      %p149 = scmp.eq.s32.totalorder %s22, 1
      %p150 = por %p148, %p149
      %p151 = scmp.ne.s32.totalorder %s142, %s143
      %p152 = scmp.eq.s32.totalorder %s22, 0
      %p153 = por %p151, %p152
      %p154 = scmp.ne.s32.totalorder %s142, %s143
      %p155 = scmp.eq.s32.totalorder %s23, 1
      %p156 = por %p154, %p155
      %p158 = scmp.ne.s32.totalorder %s143, %s157
      %p159 = scmp.eq.s32.totalorder %s23, 0
      %p160 = por %p158, %p159
      %s162 = sadd.s32 %s161, 1
      %p165 = scmp.eq.s32.totalorder %s17, 1
      %p166 = scmp.ne.s32.totalorder %s161, %s163
      %p167 = scmp.eq.s32.totalorder %s17, 0
      %p168 = por %p166, %p167
      %p169 = scmp.ne.s32.totalorder %s161, %s163
      %p170 = scmp.eq.s32.totalorder %s22, 1
      %p171 = por %p169, %p170
      %p172 = scmp.ne.s32.totalorder %s163, %s164
      %p173 = scmp.eq.s32.totalorder %s22, 0
      %p174 = por %p172, %p173
      %p175 = scmp.ne.s32.totalorder %s163, %s164
      %p176 = scmp.eq.s32.totalorder %s23, 1
      %p177 = por %p175, %p176
      %p179 = scmp.ne.s32.totalorder %s164, %s178
      %p180 = scmp.eq.s32.totalorder %s23, 0
      %p181 = por %p179, %p180
      %s183 = sadd.s32 %s182, 1
      %p186 = scmp.eq.s32.totalorder %s17, 1
      %p187 = scmp.ne.s32.totalorder %s182, %s184
      %p188 = scmp.eq.s32.totalorder %s17, 0
      %p189 = por %p187, %p188
      %p190 = scmp.ne.s32.totalorder %s182, %s184
      %p191 = scmp.eq.s32.totalorder %s22, 1
      %p192 = por %p190, %p191
      %p193 = scmp.ne.s32.totalorder %s184, %s185
      %p194 = scmp.eq.s32.totalorder %s22, 0
      %p195 = por %p193, %p194
      %p196 = scmp.ne.s32.totalorder %s184, %s185
      %p197 = scmp.eq.s32.totalorder %s23, 1
      %p198 = por %p196, %p197
      %p200 = scmp.ne.s32.totalorder %s185, %s199
      %p201 = scmp.eq.s32.totalorder %s23, 0
      %p202 = por %p200, %p201
      %s203 = ssub.s32 %s17, %s24
      %p204 = scmp.eq.s32.totalorder %s203, 0
      %s206 = sadd.s32 %s205, 1
      %s207 = scalar_select %p204, %s205, %s206
      %p210 = pneg %p204
      %p211 = scmp.eq.s32.totalorder %s17, 1
      %p212 = por %p210, %p211
      %p213 = scmp.ne.s32.totalorder %s205, %s208
      %p214 = scmp.eq.s32.totalorder %s17, 0
      %p215 = por %p213, %p214
      %p216 = scmp.ne.s32.totalorder %s205, %s208
      %p217 = scmp.eq.s32.totalorder %s22, 1
      %p218 = por %p216, %p217
      %p219 = scmp.ne.s32.totalorder %s208, %s209
      %p220 = scmp.eq.s32.totalorder %s22, 0
      %p221 = por %p219, %p220
      %p222 = scmp.ne.s32.totalorder %s208, %s209
      %p223 = scmp.eq.s32.totalorder %s23, 1
      %p224 = por %p222, %p223
      %p226 = scmp.ne.s32.totalorder %s209, %s225
      %p227 = scmp.eq.s32.totalorder %s23, 0
      %p228 = por %p226, %p227
      %p229 = scmp.le.s32.totalorder 1, %s17
      %p230 = scmp.lt.s32.totalorder %s17, 3
      %p231 = pnand %p229, %p230
      %p232 = pneg %p231
      // Predicated region
      $region9: #{tpu_custom_call.1} parent=5 // pred_check
        _
      $region10: #{tpu_custom_call.1} parent=5 // pred_check_branch
        %234 = sbr.rel (%p231) target = $region12
      $region11: #{tpu_custom_call.1} parent=5 // pred_region
        %s235 = ssub.s32 %s17, 1
        // Predicated region
        $region13: #{tpu_custom_call.1} parent=11 // pred_check
          %p236 = pneg %p90
        $region14: #{tpu_custom_call.1} parent=11 // pred_check_branch
          %238 = sbr.rel (%p236) target = $region16
        $region15: #{tpu_custom_call.1} parent=11 // pred_region
          _
        $region16: #{tpu_custom_call.1} parent=11 // pred_fallthru
          _
        // Predicated region
        $region17: #{tpu_custom_call.1} parent=11 // pred_check
          %p239 = pneg %p111
        $region18: #{tpu_custom_call.1} parent=11 // pred_check_branch
          %241 = sbr.rel (%p239) target = $region20
        $region19: #{tpu_custom_call.1} parent=11 // pred_region
          _
        $region20: #{tpu_custom_call.1} parent=11 // pred_fallthru
          _
        // Predicated region
        $region21: #{tpu_custom_call.1} parent=11 // pred_check
          %p242 = pneg %p132
        $region22: #{tpu_custom_call.1} parent=11 // pred_check_branch
          %244 = sbr.rel (%p242) target = $region24
        $region23: #{tpu_custom_call.1} parent=11 // pred_region
          _
        $region24: #{tpu_custom_call.1} parent=11 // pred_fallthru
          _
        // Predicated region
        $region25: #{tpu_custom_call.1} parent=11 // pred_check
          %p245 = pneg %p153
        $region26: #{tpu_custom_call.1} parent=11 // pred_check_branch
          %247 = sbr.rel (%p245) target = $region28
        $region27: #{tpu_custom_call.1} parent=11 // pred_region
          _
        $region28: #{tpu_custom_call.1} parent=11 // pred_fallthru
          _
        // Predicated region
        $region29: #{tpu_custom_call.1} parent=11 // pred_check
          %p248 = pneg %p174
        $region30: #{tpu_custom_call.1} parent=11 // pred_check_branch
          %250 = sbr.rel (%p248) target = $region32
        $region31: #{tpu_custom_call.1} parent=11 // pred_region
          _
        $region32: #{tpu_custom_call.1} parent=11 // pred_fallthru
          _
        // Predicated region
        $region33: #{tpu_custom_call.1} parent=11 // pred_check
          %p251 = pneg %p195
        $region34: #{tpu_custom_call.1} parent=11 // pred_check_branch
          %253 = sbr.rel (%p251) target = $region36
        $region35: #{tpu_custom_call.1} parent=11 // pred_region
          _
        $region36: #{tpu_custom_call.1} parent=11 // pred_fallthru
          _
      $region12: #{tpu_custom_call.1} parent=5 // pred_fallthru
        _
      %p254 = scmp.lt.s32.totalorder %s17, 2
      // Predicated region
      $region37: #{tpu_custom_call.1} parent=5 // pred_check
        %p255 = pneg %p254
      $region38: #{tpu_custom_call.1} parent=5 // pred_check_branch
        %257 = sbr.rel (%p255) target = $region40
      $region39: #{tpu_custom_call.1} parent=5 // pred_region
        // Predicated region
        $region41: #{tpu_custom_call.1} parent=39 // pred_check
          %p258 = pneg %p37
        $region42: #{tpu_custom_call.1} parent=39 // pred_check_branch
          %260 = sbr.rel (%p258) target = $region44
        $region43: #{tpu_custom_call.1} parent=39 // pred_region
          %s261 = sand.u32 %s27, 1
          %s262 = sand.u32 %s27, 1
          %s263 = smul.addr %s262, 80
          %s264 = scalar_lea.vmem [#allocation2], %s263
          %s265 = smul.addr %s17, 8
          %s266 = scalar_lea.vmem %s0, %s265
          // Predicated region
          $region45: #{tpu_custom_call.1} parent=43 // pred_check
            _
          $region46: #{tpu_custom_call.1} parent=43 // pred_check_branch
            %268 = sbr.rel (0) target = $region48
          $region47: #{tpu_custom_call.1} parent=43 // pred_region
            // Predicated region
            $region49: #{tpu_custom_call.1} parent=47 // pred_check
              _
            $region50: #{tpu_custom_call.1} parent=47 // pred_check_branch
              %270 = sbr.rel (0) target = $region52
            $region51: #{tpu_custom_call.1} parent=47 // pred_region
              // Predicated region
              $region64: #{tpu_custom_call.1} parent=51 // pred_check
                _
              $region65: #{tpu_custom_call.1} parent=51 // pred_check_branch
                %303 = sbr.rel (0) target = $region67
              $region66: #{tpu_custom_call.1} parent=51 // pred_region
                loop: start=0, step=1, limit=1
                $region68: #{tpu_custom_call.1} parent=66 // loop_pre_header
                  _
                $region69: #{tpu_custom_call.1} parent=66 // loop_header
                  %s305 = sphi 0, %s309
                  %p306 = scmp.ge.s32.totalorder %s305, 1
                  %s310 = sphi %s266, %s266
                  %s311 = sphi %s264, %s264
                $region70: #{tpu_custom_call.1} parent=66 // loop_header_branch
                  %308 = sbr.rel (%p306) target = $region74
                $region71: #{tpu_custom_call.1} parent=66 // loop_body
                  %v312 = vld [vmem:[%s310] sm:$0xff]
                  %313 = vst [vmem:[%s311] sm:$0xff] %v312
                  %v314 = vld [vmem:[%s310 + $0x10] sm:$0xff]
                  %315 = vst [vmem:[%s311 + $0x8] sm:$0xff] %v314
                  %v316 = vld [vmem:[%s310 + $0x20] sm:$0xff]
                  %317 = vst [vmem:[%s311 + $0x10] sm:$0xff] %v316
                  %v318 = vld [vmem:[%s310 + $0x30] sm:$0xff]
                  %319 = vst [vmem:[%s311 + $0x18] sm:$0xff] %v318
                  %v320 = vld [vmem:[%s310 + $0x40] sm:$0xff]
                  %321 = vst [vmem:[%s311 + $0x20] sm:$0xff] %v320
                  %v322 = vld [vmem:[%s310 + $0x50] sm:$0xff]
                  %323 = vst [vmem:[%s311 + $0x28] sm:$0xff] %v322
                  %v324 = vld [vmem:[%s310 + $0x60] sm:$0xff]
                  %325 = vst [vmem:[%s311 + $0x30] sm:$0xff] %v324
                  %v326 = vld [vmem:[%s310 + $0x70] sm:$0xff]
                  %327 = vst [vmem:[%s311 + $0x38] sm:$0xff] %v326
                  %v328 = vld [vmem:[%s310 + $0x80] sm:$0xff]
                  %329 = vst [vmem:[%s311 + $0x40] sm:$0xff] %v328
                  %v330 = vld [vmem:[%s310 + $0x90] sm:$0xff]
                  %331 = vst [vmem:[%s311 + $0x48] sm:$0xff] %v330
                $region72: #{tpu_custom_call.1} parent=66 // loop_footer
                  %s309 = sadd.s32 1, %s305
                $region73: #{tpu_custom_call.1} parent=66 // loop_footer_branch
                  %304 = sbr.rel target = $region69
                $region74: #{tpu_custom_call.1} parent=66 // loop_exit
                  _
              $region67: #{tpu_custom_call.1} parent=51 // pred_fallthru
                _
              // Predicated region
              $region75: #{tpu_custom_call.1} parent=51 // pred_check
                _
              $region76: #{tpu_custom_call.1} parent=51 // pred_check_branch
                %333 = sbr.rel target = $region78
              $region77: #{tpu_custom_call.1} parent=51 // pred_region
                _
              $region78: #{tpu_custom_call.1} parent=51 // pred_fallthru
                _
            $region52: #{tpu_custom_call.1} parent=47 // pred_fallthru
              _
            // Predicated region
            $region53: #{tpu_custom_call.1} parent=47 // pred_check
              _
            $region54: #{tpu_custom_call.1} parent=47 // pred_check_branch
              %272 = sbr.rel target = $region56
            $region55: #{tpu_custom_call.1} parent=47 // pred_region
              loop: start=0, step=1, limit=1
              $region57: #{tpu_custom_call.1} parent=55 // loop_pre_header
                _
              $region58: #{tpu_custom_call.1} parent=55 // loop_header
                %s275 = sphi 0, %s279
                %p276 = scmp.ge.s32.totalorder %s275, 1
                %s280 = sphi %s266, %s266
                %s281 = sphi %s264, %s264
              $region59: #{tpu_custom_call.1} parent=55 // loop_header_branch
                %278 = sbr.rel (%p276) target = $region63
              $region60: #{tpu_custom_call.1} parent=55 // loop_body
                %v282 = vld [vmem:[%s280] sm:$0xff]
                %283 = vst [vmem:[%s281] sm:$0xff] %v282
                %v284 = vld [vmem:[%s280 + $0x10] sm:$0xff]
                %285 = vst [vmem:[%s281 + $0x8] sm:$0xff] %v284
                %v286 = vld [vmem:[%s280 + $0x20] sm:$0xff]
                %287 = vst [vmem:[%s281 + $0x10] sm:$0xff] %v286
                %v288 = vld [vmem:[%s280 + $0x30] sm:$0xff]
                %289 = vst [vmem:[%s281 + $0x18] sm:$0xff] %v288
                %v290 = vld [vmem:[%s280 + $0x40] sm:$0xff]
                %291 = vst [vmem:[%s281 + $0x20] sm:$0xff] %v290
                %v292 = vld [vmem:[%s280 + $0x50] sm:$0xff]
                %293 = vst [vmem:[%s281 + $0x28] sm:$0xff] %v292
                %v294 = vld [vmem:[%s280 + $0x60] sm:$0xff]
                %295 = vst [vmem:[%s281 + $0x30] sm:$0xff] %v294
                %v296 = vld [vmem:[%s280 + $0x70] sm:$0xff]
                %297 = vst [vmem:[%s281 + $0x38] sm:$0xff] %v296
                %v298 = vld [vmem:[%s280 + $0x80] sm:$0xff]
                %299 = vst [vmem:[%s281 + $0x40] sm:$0xff] %v298
                %v300 = vld [vmem:[%s280 + $0x90] sm:$0xff]
                %301 = vst [vmem:[%s281 + $0x48] sm:$0xff] %v300
              $region61: #{tpu_custom_call.1} parent=55 // loop_footer
                %s279 = sadd.s32 1, %s275
              $region62: #{tpu_custom_call.1} parent=55 // loop_footer_branch
                %274 = sbr.rel target = $region58
              $region63: #{tpu_custom_call.1} parent=55 // loop_exit
                _
            $region56: #{tpu_custom_call.1} parent=47 // pred_fallthru
              _
          $region48: #{tpu_custom_call.1} parent=43 // pred_fallthru
            _
          %334 = vnop
        $region44: #{tpu_custom_call.1} parent=39 // pred_fallthru
          _
        // Predicated region
        $region79: #{tpu_custom_call.1} parent=39 // pred_check
          %p335 = pneg %p63
        $region80: #{tpu_custom_call.1} parent=39 // pred_check_branch
          %337 = sbr.rel (%p335) target = $region82
        $region81: #{tpu_custom_call.1} parent=39 // pred_region
          %s338 = sand.u32 %s53, 1
          %s339 = sand.u32 %s53, 1
          %s340 = smul.addr %s339, 32
          %s341 = scalar_lea.vmem [#allocation3], %s340
          %s342 = smul.addr %s17, 8
          %s343 = scalar_lea.vmem %s1, %s342
          // Predicated region
          $region83: #{tpu_custom_call.1} parent=81 // pred_check
            _
          $region84: #{tpu_custom_call.1} parent=81 // pred_check_branch
            %345 = sbr.rel (0) target = $region86
          $region85: #{tpu_custom_call.1} parent=81 // pred_region
            // Predicated region
            $region87: #{tpu_custom_call.1} parent=85 // pred_check
              _
            $region88: #{tpu_custom_call.1} parent=85 // pred_check_branch
              %347 = sbr.rel (0) target = $region90
            $region89: #{tpu_custom_call.1} parent=85 // pred_region
              // Predicated region
              $region102: #{tpu_custom_call.1} parent=89 // pred_check
                _
              $region103: #{tpu_custom_call.1} parent=89 // pred_check_branch
                %368 = sbr.rel (0) target = $region105
              $region104: #{tpu_custom_call.1} parent=89 // pred_region
                loop: start=0, step=1, limit=1
                $region106: #{tpu_custom_call.1} parent=104 // loop_pre_header
                  _
                $region107: #{tpu_custom_call.1} parent=104 // loop_header
                  %s370 = sphi 0, %s374
                  %p371 = scmp.ge.s32.totalorder %s370, 1
                  %s375 = sphi %s343, %s343
                  %s376 = sphi %s341, %s341
                $region108: #{tpu_custom_call.1} parent=104 // loop_header_branch
                  %373 = sbr.rel (%p371) target = $region112
                $region109: #{tpu_custom_call.1} parent=104 // loop_body
                  %v377 = vld [vmem:[%s375] sm:$0xff]
                  %378 = vst [vmem:[%s376] sm:$0xff] %v377
                  %v379 = vld [vmem:[%s375 + $0x10] sm:$0xff]
                  %380 = vst [vmem:[%s376 + $0x8] sm:$0xff] %v379
                  %v381 = vld [vmem:[%s375 + $0x20] sm:$0xff]
                  %382 = vst [vmem:[%s376 + $0x10] sm:$0xff] %v381
                  %v383 = vld [vmem:[%s375 + $0x30] sm:$0xff]
                  %384 = vst [vmem:[%s376 + $0x18] sm:$0xff] %v383
                $region110: #{tpu_custom_call.1} parent=104 // loop_footer
                  %s374 = sadd.s32 1, %s370
                $region111: #{tpu_custom_call.1} parent=104 // loop_footer_branch
                  %369 = sbr.rel target = $region107
                $region112: #{tpu_custom_call.1} parent=104 // loop_exit
                  _
              $region105: #{tpu_custom_call.1} parent=89 // pred_fallthru
                _
              // Predicated region
              $region113: #{tpu_custom_call.1} parent=89 // pred_check
                _
              $region114: #{tpu_custom_call.1} parent=89 // pred_check_branch
                %386 = sbr.rel target = $region116
              $region115: #{tpu_custom_call.1} parent=89 // pred_region
                _
              $region116: #{tpu_custom_call.1} parent=89 // pred_fallthru
                _
            $region90: #{tpu_custom_call.1} parent=85 // pred_fallthru
              _
            // Predicated region
            $region91: #{tpu_custom_call.1} parent=85 // pred_check
              _
            $region92: #{tpu_custom_call.1} parent=85 // pred_check_branch
              %349 = sbr.rel target = $region94
            $region93: #{tpu_custom_call.1} parent=85 // pred_region
              loop: start=0, step=1, limit=1
              $region95: #{tpu_custom_call.1} parent=93 // loop_pre_header
                _
              $region96: #{tpu_custom_call.1} parent=93 // loop_header
                %s352 = sphi 0, %s356
                %p353 = scmp.ge.s32.totalorder %s352, 1
                %s357 = sphi %s343, %s343
                %s358 = sphi %s341, %s341
              $region97: #{tpu_custom_call.1} parent=93 // loop_header_branch
                %355 = sbr.rel (%p353) target = $region101
              $region98: #{tpu_custom_call.1} parent=93 // loop_body
                %v359 = vld [vmem:[%s357] sm:$0xff]
                %360 = vst [vmem:[%s358] sm:$0xff] %v359
                %v361 = vld [vmem:[%s357 + $0x10] sm:$0xff]
                %362 = vst [vmem:[%s358 + $0x8] sm:$0xff] %v361
                %v363 = vld [vmem:[%s357 + $0x20] sm:$0xff]
                %364 = vst [vmem:[%s358 + $0x10] sm:$0xff] %v363
                %v365 = vld [vmem:[%s357 + $0x30] sm:$0xff]
                %366 = vst [vmem:[%s358 + $0x18] sm:$0xff] %v365
              $region99: #{tpu_custom_call.1} parent=93 // loop_footer
                %s356 = sadd.s32 1, %s352
              $region100: #{tpu_custom_call.1} parent=93 // loop_footer_branch
                %351 = sbr.rel target = $region96
              $region101: #{tpu_custom_call.1} parent=93 // loop_exit
                _
            $region94: #{tpu_custom_call.1} parent=85 // pred_fallthru
              _
          $region86: #{tpu_custom_call.1} parent=81 // pred_fallthru
            _
          %387 = vnop
        $region82: #{tpu_custom_call.1} parent=39 // pred_fallthru
          _
      $region40: #{tpu_custom_call.1} parent=5 // pred_fallthru
        _
      %p388 = scmp.le.s32.totalorder 1, %s17
      %p389 = scmp.lt.s32.totalorder %s17, 3
      %p390 = pnand %p388, %p389
      %p391 = pneg %p390
      // Predicated region
      $region117: #{tpu_custom_call.1} parent=5 // pred_check
        _
      $region118: #{tpu_custom_call.1} parent=5 // pred_check_branch
        %393 = sbr.rel (%p390) target = $region120
      $region119: #{tpu_custom_call.1} parent=5 // pred_region
        %s394 = ssub.s32 %s17, 1
        %s395 = sand.u32 %s30, 1
        %s396 = sand.u32 %s30, 1
        %s397 = smul.addr %s396, 80
        %s398 = scalar_lea.vmem [#allocation2], %s397
        // Predicated region
        $region121: #{tpu_custom_call.1} parent=119 // pred_check
          %p399 = pneg %p43
        $region122: #{tpu_custom_call.1} parent=119 // pred_check_branch
          %401 = sbr.rel (%p399) target = $region124
        $region123: #{tpu_custom_call.1} parent=119 // pred_region
          _
        $region124: #{tpu_custom_call.1} parent=119 // pred_fallthru
          _
        %s402 = sand.u32 %s56, 1
        %s403 = sand.u32 %s56, 1
        %s404 = smul.addr %s403, 32
        %s405 = scalar_lea.vmem [#allocation3], %s404
        // Predicated region
        $region125: #{tpu_custom_call.1} parent=119 // pred_check
          %p406 = pneg %p69
        $region126: #{tpu_custom_call.1} parent=119 // pred_check_branch
          %408 = sbr.rel (%p406) target = $region128
        $region127: #{tpu_custom_call.1} parent=119 // pred_region
          _
        $region128: #{tpu_custom_call.1} parent=119 // pred_fallthru
          _
        %s409 = sand.u32 %s30, 1
        %s410 = sand.u32 %s30, 1
        %s411 = smul.addr %s410, 80
        %s412 = scalar_lea.vmem [#allocation2], %s411
        %p413 = pneg %p43
        %p414 = pneg %p40
        %s415 = sand.u32 %s56, 1
        %s416 = sand.u32 %s56, 1
        %s417 = smul.addr %s416, 32
        %s418 = scalar_lea.vmem [#allocation3], %s417
        %p419 = pneg %p69
        %p420 = pneg %p66
        %p421 = pneg %p90
        %p422 = pneg %p87
        %p423 = pneg %p111
        %p424 = pneg %p108
        %p425 = pneg %p132
        %p426 = pneg %p129
        %p427 = pneg %p153
        %p428 = pneg %p150
        %p429 = pneg %p174
        %p430 = pneg %p171
        %p431 = pneg %p195
        %p432 = pneg %p192
        %p433 = pneg %p221
        %p434 = pneg %p218
        %s435 = sand.u32 %s208, 1
        %s436 = scalar_lea.sflag [#allocation5], %s435
        %s437 = sand.u32 %s208, 1
        %s438 = smul.addr %s437, 32
        %s439 = scalar_lea.vmem [#allocation4], %s438
        %v440 = vld [vmem:[%s398] sm:$0xff]
        %v441 = vld [vmem:[%s398 + $0x8] sm:$0xff]
        %v442 = vld [vmem:[%s398 + $0x10] sm:$0xff]
        %v443 = vld [vmem:[%s398 + $0x18] sm:$0xff]
        %v444 = vld [vmem:[%s398 + $0x20] sm:$0xff]
        %v445 = vld [vmem:[%s398 + $0x28] sm:$0xff]
        %v446 = vld [vmem:[%s398 + $0x30] sm:$0xff]
        %v447 = vld [vmem:[%s398 + $0x38] sm:$0xff]
        %v448 = vld [vmem:[%s398 + $0x40] sm:$0xff]
        %v449 = vld [vmem:[%s398 + $0x48] sm:$0xff]
        %v450 = vld [vmem:[%s405] sm:$0xff]
        %v451 = vld [vmem:[%s405 + $0x8] sm:$0xff]
        %v452 = vld [vmem:[%s405 + $0x10] sm:$0xff]
        %v453 = vld [vmem:[%s405 + $0x18] sm:$0xff]
        %v454 = vld [vmem:[%s2] sm:$0xff]
        %v455 = vld [vmem:[%s2 + $0x8] sm:$0xff]
        %v456 = vld [vmem:[%s2 + $0x10] sm:$0xff]
        %v457 = vld [vmem:[%s2 + $0x18] sm:$0xff]
        %v458 = vld [vmem:[%s2 + $0x20] sm:$0xff]
        %v459 = vld [vmem:[%s2 + $0x28] sm:$0xff]
        %v460 = vld [vmem:[%s3] sm:$0xff]
        %v461 = vld [vmem:[%s3 + $0x8] sm:$0xff]
        %v462 = vld [vmem:[%s3 + $0x10] sm:$0xff]
        %v463 = vld [vmem:[%s3 + $0x18] sm:$0xff]
        %v464 = vld [vmem:[%s3 + $0x20] sm:$0xff]
        %v465 = vld [vmem:[%s3 + $0x28] sm:$0xff]
        %467 = vset.pattern.permute.xlu0 0
        %468 = vperm.xlu0 %467, %v460
        %v469 = vpop.permute.xlu0 %468
        %472 = vset.pattern.permute.xlu0 0
        %473 = vperm.xlu0 %472, %v461
        %v474 = vpop.permute.xlu0 %473
        %477 = vset.pattern.permute.xlu0 0
        %478 = vperm.xlu0 %477, %v462
        %v479 = vpop.permute.xlu0 %478
        %482 = vset.pattern.permute.xlu0 0
        %483 = vperm.xlu0 %482, %v463
        %v484 = vpop.permute.xlu0 %483
        %487 = vset.pattern.permute.xlu0 0
        %488 = vperm.xlu0 %487, %v464
        %v489 = vpop.permute.xlu0 %488
        %492 = vset.pattern.permute.xlu0 0
        %493 = vperm.xlu0 %492, %v465
        %v494 = vpop.permute.xlu0 %493
        %vm496 = vcmask 130048
        %v498 = vsel %vm496, %v454, 0
        %v501 = vsel %vm496, %v455, 0
        %v504 = vsel %vm496, %v456, 0
        %v507 = vsel %vm496, %v457, 0
        %v510 = vsel %vm496, %v458, 0
        %v513 = vsel %vm496, %v459, 0
        %515 = vmatprep.subr.mxu0 0.0
        %516 = vmatpush1.msra.mxu0 %v444
        %517 = vmatprep.subr.mxu0 0.0
        %518 = vmatpush1.msra.mxu0 %v445
        %519 = vmatprep.subr.mxu0 0.0
        %520 = vmatpush1.msra.mxu0 0.0
        %521 = vmatprep.subr.mxu0 0.0
        %522 = vmatpush1.msra.mxu0 0.0
        %523 = vmatprep.subr.mxu0 0.0
        %524 = vmatpush1.msra.mxu0 0.0
        %525 = vmatprep.subr.mxu0 0.0
        %526 = vmatpush1.msra.mxu0 0.0
        %527 = vmatprep.subr.mxu0 0.0
        %528 = vmatpush1.msra.mxu0 0.0
        %529 = vmatprep.subr.mxu0 0.0
        %530 = vmatpush1.msra.mxu0 0.0
        %531 = vmatprep.subr.mxu0 0.0
        %532 = vmatpush1.msra.mxu0 0.0
        %533 = vmatprep.subr.mxu0 0.0
        %534 = vmatpush1.msra.mxu0 0.0
        %535 = vmatprep.subr.mxu0 0.0
        %536 = vmatpush1.msra.mxu0 0.0
        %537 = vmatprep.subr.mxu0 0.0
        %538 = vmatpush1.msra.mxu0 0.0
        %539 = vmatprep.subr.mxu0 0.0
        %540 = vmatpush1.msra.mxu0 0.0
        %541 = vmatprep.subr.mxu0 0.0
        %542 = vmatpush1.msra.mxu0 0.0
        %543 = vmatprep.subr.mxu0 0.0
        %544 = vmatpush1.msra.mxu0 0.0
        %545 = vmatprep.subr.mxu0 0.0
        %546 = vmatpush1.msra.mxu0 0.0
        %547 = vmatprep.subr.mxu0 0.0
        %548 = vmatpush1.msra.mxu0 0.0
        %549 = vmatprep.subr.mxu0 0.0
        %550 = vmatpush1.msra.mxu0 0.0
        %551 = vmatprep.subr.mxu0 0.0
        %552 = vmatpush1.msra.mxu0 0.0
        %553 = vmatprep.subr.mxu0 0.0
        %554 = vmatpush1.msra.mxu0 0.0
        %555 = vmatprep.subr.mxu0 0.0
        %556 = vmatpush1.msra.mxu0 0.0
        %557 = vmatprep.subr.mxu0 0.0
        %558 = vmatpush1.msra.mxu0 0.0
        %559 = vmatprep.subr.mxu0 0.0
        %560 = vmatpush1.msra.mxu0 0.0
        %561 = vmatprep.subr.mxu0 0.0
        %562 = vmatpush1.msra.mxu0 0.0
        %563 = vmatprep.subr.mxu0 0.0
        %564 = vmatpush1.msra.mxu0 0.0
        %565 = vmatprep.subr.mxu0 0.0
        %566 = vmatpush1.msra.mxu0 0.0
        %567 = vmatprep.subr.mxu0 0.0
        %568 = vmatpush1.msra.mxu0 0.0
        %569 = vmatprep.subr.mxu0 0.0
        %570 = vmatpush1.msra.mxu0 0.0
        %571 = vmatprep.subr.mxu0 0.0
        %572 = vmatpush1.msra.mxu0 0.0
        %573 = vmatprep.subr.mxu0 0.0
        %574 = vmatpush1.msra.mxu0 0.0
        %575 = vmatprep.subr.mxu0 0.0
        %576 = vmatpush1.msra.mxu0 0.0
        %577 = vmatprep.subr.mxu0 0.0
        %578 = vmatpush1.msra.mxu0 0.0
        %579 = vmatprep.mubr.f32.mxu0 0.0
        %580 = vmatmul.mubr.f32.gmra.mrb[0].mxu0 %v498
        %v581 = vpop.f32.mrb[0].mxu0
        %v582 = vadd.f32 %v469, %v581
        %v583 = vpop.f32.mrb[0].mxu0
        %584 = vmatprep.mubr.f32.mxu0 0.0
        %585 = vmatmul.mubr.f32.gmra.mrb[0].mxu0 %v501
        %v586 = vpop.f32.mrb[0].mxu0
        %v587 = vadd.f32 %v474, %v586
        %v588 = vpop.f32.mrb[0].mxu0
        %589 = vmatprep.mubr.f32.mxu0 0.0
        %590 = vmatmul.mubr.f32.gmra.mrb[0].mxu0 %v504
        %v591 = vpop.f32.mrb[0].mxu0
        %v592 = vadd.f32 %v479, %v591
        %v593 = vpop.f32.mrb[0].mxu0
        %594 = vmatprep.mubr.f32.mxu0 0.0
        %595 = vmatmul.mubr.f32.gmra.mrb[0].mxu0 %v507
        %v596 = vpop.f32.mrb[0].mxu0
        %v597 = vadd.f32 %v484, %v596
        %v598 = vpop.f32.mrb[0].mxu0
        %599 = vmatprep.mubr.f32.mxu0 0.0
        %600 = vmatmul.mubr.f32.gmra.mrb[0].mxu0 %v510
        %v601 = vpop.f32.mrb[0].mxu0
        %v602 = vadd.f32 %v489, %v601
        %v603 = vpop.f32.mrb[0].mxu0
        %604 = vmatprep.mubr.f32.mxu0 0.0
        %605 = vmatmul.mubr.f32.gmra.mrb[0].mxu0 %v513
        %v606 = vpop.f32.mrb[0].mxu0
        %v607 = vadd.f32 %v494, %v606
        %v608 = vpop.f32.mrb[0].mxu0
        %609 = vdwg.mxu0
        %v610 = vmax.f32 %v582, 0.0
        %v611 = vmax.f32 %v587, 0.0
        %v612 = vmax.f32 %v592, 0.0
        %v613 = vmax.f32 %v597, 0.0
        %v614 = vmax.f32 %v602, 0.0
        %v615 = vmax.f32 %v607, 0.0
        %v616 = vsub.f32 0.0, %v610
        %v617 = vsub.f32 0.0, %v611
        %v618 = vsub.f32 0.0, %v612
        %v619 = vsub.f32 0.0, %v613
        %v620 = vsub.f32 0.0, %v614
        %v621 = vsub.f32 0.0, %v615
        %v622 = vmul.f32 %v616, 1.442695
        %v623 = vpow.pop %v622
        %v624 = vmul.f32 %v617, 1.442695
        %v625 = vpow.pop %v624
        %v626 = vmul.f32 %v618, 1.442695
        %v627 = vpow.pop %v626
        %v628 = vmul.f32 %v619, 1.442695
        %v629 = vpow.pop %v628
        %v630 = vmul.f32 %v620, 1.442695
        %v631 = vpow.pop %v630
        %v632 = vmul.f32 %v621, 1.442695
        %v633 = vpow.pop %v632
        %v634 = vmul.f32 %v623, %v448
        %v635 = vmul.f32 %v625, %v449
        %v636 = vmul.f32 %v634, %v442
        %v637 = vmul.f32 %v635, %v443
        %v638 = vsub.f32 1.0, %v634
        %v639 = vsub.f32 1.0, %v635
        %v640 = vmul.f32 %v638, %v440
        %v641 = vmul.f32 %v639, %v441
        %v642 = vadd.f32 %v636, %v640
        %v643 = vadd.f32 %v637, %v641
        %v644 = vmul.f32 %v446, %v440
        %v645 = vmul.f32 %v447, %v441
        %v646 = vsub.f32 1.0, %v446
        %v647 = vsub.f32 1.0, %v447
        %v648 = vmul.f32 %v646, %v642
        %v649 = vmul.f32 %v647, %v643
        %v650 = vadd.f32 %v644, %v648
        %v651 = vadd.f32 %v645, %v649
        %v652 = vmul.f32 %v627, %v450
        %v653 = vmul.f32 %v629, %v451
        %v654 = vmul.f32 %v631, %v452
        %v655 = vmul.f32 %v633, %v453
        %v656 = vld [vmem:[%s4] sm:$0xff]
        %v657 = vld [vmem:[%s4 + $0x8] sm:$0xff]
        %v658 = vld [vmem:[%s4 + $0x10] sm:$0xff]
        %v659 = vld [vmem:[%s4 + $0x18] sm:$0xff]
        %v660 = vld [vmem:[%s4 + $0x20] sm:$0xff]
        %v661 = vld [vmem:[%s4 + $0x28] sm:$0xff]
        %v662 = vld [vmem:[%s4 + $0x30] sm:$0xff]
        %v663 = vld [vmem:[%s4 + $0x38] sm:$0xff]
        %v664 = vld [vmem:[%s4 + $0x40] sm:$0xff]
        %v665 = vld [vmem:[%s4 + $0x48] sm:$0xff]
        %v666 = vld [vmem:[%s4 + $0x50] sm:$0xff]
        %v667 = vld [vmem:[%s4 + $0x58] sm:$0xff]
        %v668 = vld [vmem:[%s7] sm:$0xff]
        %v669 = vld [vmem:[%s7 + $0x8] sm:$0xff]
        %v670 = vld [vmem:[%s7 + $0x10] sm:$0xff]
        %v671 = vld [vmem:[%s7 + $0x18] sm:$0xff]
        %v672 = vld [vmem:[%s7 + $0x20] sm:$0xff]
        %v673 = vld [vmem:[%s7 + $0x28] sm:$0xff]
        %v674 = vld [vmem:[%s7 + $0x30] sm:$0xff]
        %v675 = vld [vmem:[%s7 + $0x38] sm:$0xff]
        %v676 = vld [vmem:[%s7 + $0x40] sm:$0xff]
        %v677 = vld [vmem:[%s7 + $0x48] sm:$0xff]
        %v678 = vld [vmem:[%s7 + $0x50] sm:$0xff]
        %v679 = vld [vmem:[%s7 + $0x58] sm:$0xff]
        %681 = vset.pattern.permute.xlu0 0
        %682 = vperm.xlu0 %681, %v668
        %v683 = vpop.permute.xlu0 %682
        %686 = vset.pattern.permute.xlu0 0
        %687 = vperm.xlu0 %686, %v669
        %v688 = vpop.permute.xlu0 %687
        %691 = vset.pattern.permute.xlu0 0
        %692 = vperm.xlu0 %691, %v670
        %v693 = vpop.permute.xlu0 %692
        %696 = vset.pattern.permute.xlu0 0
        %697 = vperm.xlu0 %696, %v671
        %v698 = vpop.permute.xlu0 %697
        %701 = vset.pattern.permute.xlu0 0
        %702 = vperm.xlu0 %701, %v672
        %v703 = vpop.permute.xlu0 %702
        %706 = vset.pattern.permute.xlu0 0
        %707 = vperm.xlu0 %706, %v673
        %v708 = vpop.permute.xlu0 %707
        %711 = vset.pattern.permute.xlu0 0
        %712 = vperm.xlu0 %711, %v674
        %v713 = vpop.permute.xlu0 %712
        %716 = vset.pattern.permute.xlu0 0
        %717 = vperm.xlu0 %716, %v675
        %v718 = vpop.permute.xlu0 %717
        %721 = vset.pattern.permute.xlu0 0
        %722 = vperm.xlu0 %721, %v676
        %v723 = vpop.permute.xlu0 %722
        %726 = vset.pattern.permute.xlu0 0
        %727 = vperm.xlu0 %726, %v677
        %v728 = vpop.permute.xlu0 %727
        %731 = vset.pattern.permute.xlu0 0
        %732 = vperm.xlu0 %731, %v678
        %v733 = vpop.permute.xlu0 %732
        %736 = vset.pattern.permute.xlu0 0
        %737 = vperm.xlu0 %736, %v679
        %v738 = vpop.permute.xlu0 %737
        %vm740 = vcmask 392192
        %v742 = vsel %vm740, %v656, 0
        %v745 = vsel %vm740, %v657, 0
        %v748 = vsel %vm740, %v658, 0
        %v751 = vsel %vm740, %v659, 0
        %v754 = vsel %vm740, %v660, 0
        %v757 = vsel %vm740, %v661, 0
        %v760 = vsel %vm740, %v662, 0
        %v763 = vsel %vm740, %v663, 0
        %v766 = vsel %vm740, %v664, 0
        %v769 = vsel %vm740, %v665, 0
        %v772 = vsel %vm740, %v666, 0
        %v775 = vsel %vm740, %v667, 0
        %777 = vmatprep.subr.mxu0 0.0
        %778 = vmatpush1.msra.mxu0 %v650
        %779 = vmatprep.subr.mxu0 0.0
        %780 = vmatpush1.msra.mxu0 %v651
        %781 = vmatprep.subr.mxu0 0.0
        %782 = vmatpush1.msra.mxu0 %v446
        %783 = vmatprep.subr.mxu0 0.0
        %784 = vmatpush1.msra.mxu0 %v447
        %785 = vmatprep.subr.mxu0 0.0
        %786 = vmatpush1.msra.mxu0 %v448
        %787 = vmatprep.subr.mxu0 0.0
        %788 = vmatpush1.msra.mxu0 %v449
        %789 = vmatprep.subr.mxu0 0.0
        %790 = vmatpush1.msra.mxu0 0.0
        %791 = vmatprep.subr.mxu0 0.0
        %792 = vmatpush1.msra.mxu0 0.0
        %793 = vmatprep.subr.mxu0 0.0
        %794 = vmatpush1.msra.mxu0 0.0
        %795 = vmatprep.subr.mxu0 0.0
        %796 = vmatpush1.msra.mxu0 0.0
        %797 = vmatprep.subr.mxu0 0.0
        %798 = vmatpush1.msra.mxu0 0.0
        %799 = vmatprep.subr.mxu0 0.0
        %800 = vmatpush1.msra.mxu0 0.0
        %801 = vmatprep.subr.mxu0 0.0
        %802 = vmatpush1.msra.mxu0 0.0
        %803 = vmatprep.subr.mxu0 0.0
        %804 = vmatpush1.msra.mxu0 0.0
        %805 = vmatprep.subr.mxu0 0.0
        %806 = vmatpush1.msra.mxu0 0.0
        %807 = vmatprep.subr.mxu0 0.0
        %808 = vmatpush1.msra.mxu0 0.0
        %809 = vmatprep.subr.mxu0 0.0
        %810 = vmatpush1.msra.mxu0 0.0
        %811 = vmatprep.subr.mxu0 0.0
        %812 = vmatpush1.msra.mxu0 0.0
        %813 = vmatprep.subr.mxu0 0.0
        %814 = vmatpush1.msra.mxu0 0.0
        %815 = vmatprep.subr.mxu0 0.0
        %816 = vmatpush1.msra.mxu0 0.0
        %817 = vmatprep.subr.mxu0 0.0
        %818 = vmatpush1.msra.mxu0 0.0
        %819 = vmatprep.subr.mxu0 0.0
        %820 = vmatpush1.msra.mxu0 0.0
        %821 = vmatprep.subr.mxu0 0.0
        %822 = vmatpush1.msra.mxu0 0.0
        %823 = vmatprep.subr.mxu0 0.0
        %824 = vmatpush1.msra.mxu0 0.0
        %825 = vmatprep.subr.mxu0 0.0
        %826 = vmatpush1.msra.mxu0 0.0
        %827 = vmatprep.subr.mxu0 0.0
        %828 = vmatpush1.msra.mxu0 0.0
        %829 = vmatprep.subr.mxu0 0.0
        %830 = vmatpush1.msra.mxu0 0.0
        %831 = vmatprep.subr.mxu0 0.0
        %832 = vmatpush1.msra.mxu0 0.0
        %833 = vmatprep.subr.mxu0 0.0
        %834 = vmatpush1.msra.mxu0 0.0
        %835 = vmatprep.subr.mxu0 0.0
        %836 = vmatpush1.msra.mxu0 0.0
        %837 = vmatprep.subr.mxu0 0.0
        %838 = vmatpush1.msra.mxu0 0.0
        %839 = vmatprep.subr.mxu0 0.0
        %840 = vmatpush1.msra.mxu0 0.0
        %841 = vmatprep.mubr.f32.mxu0 0.0
        %842 = vmatmul.mubr.f32.gmra.mrb[0].mxu0 %v742
        %v843 = vpop.f32.mrb[0].mxu0
        %v844 = vadd.f32 %v683, %v843
        %v845 = vpop.f32.mrb[0].mxu0
        %846 = vmatprep.mubr.f32.mxu0 0.0
        %847 = vmatmul.mubr.f32.gmra.mrb[0].mxu0 %v745
        %v848 = vpop.f32.mrb[0].mxu0
        %v849 = vadd.f32 %v688, %v848
        %v850 = vpop.f32.mrb[0].mxu0
        %851 = vmatprep.mubr.f32.mxu0 0.0
        %852 = vmatmul.mubr.f32.gmra.mrb[0].mxu0 %v748
        %v853 = vpop.f32.mrb[0].mxu0
        %v854 = vadd.f32 %v693, %v853
        %v855 = vpop.f32.mrb[0].mxu0
        %856 = vmatprep.mubr.f32.mxu0 0.0
        %857 = vmatmul.mubr.f32.gmra.mrb[0].mxu0 %v751
        %v858 = vpop.f32.mrb[0].mxu0
        %v859 = vadd.f32 %v698, %v858
        %v860 = vpop.f32.mrb[0].mxu0
        %861 = vmatprep.mubr.f32.mxu0 0.0
        %862 = vmatmul.mubr.f32.gmra.mrb[0].mxu0 %v754
        %v863 = vpop.f32.mrb[0].mxu0
        %v864 = vadd.f32 %v703, %v863
        %v865 = vpop.f32.mrb[0].mxu0
        %866 = vmatprep.mubr.f32.mxu0 0.0
        %867 = vmatmul.mubr.f32.gmra.mrb[0].mxu0 %v757
        %v868 = vpop.f32.mrb[0].mxu0
        %v869 = vadd.f32 %v708, %v868
        %v870 = vpop.f32.mrb[0].mxu0
        %871 = vmatprep.mubr.f32.mxu0 0.0
        %872 = vmatmul.mubr.f32.gmra.mrb[0].mxu0 %v760
        %v873 = vpop.f32.mrb[0].mxu0
        %v874 = vadd.f32 %v713, %v873
        %v875 = vpop.f32.mrb[0].mxu0
        %876 = vmatprep.mubr.f32.mxu0 0.0
        %877 = vmatmul.mubr.f32.gmra.mrb[0].mxu0 %v763
        %v878 = vpop.f32.mrb[0].mxu0
        %v879 = vadd.f32 %v718, %v878
        %v880 = vpop.f32.mrb[0].mxu0
        %881 = vmatprep.mubr.f32.mxu0 0.0
        %882 = vmatmul.mubr.f32.gmra.mrb[0].mxu0 %v766
        %v883 = vpop.f32.mrb[0].mxu0
        %v884 = vadd.f32 %v723, %v883
        %v885 = vpop.f32.mrb[0].mxu0
        %886 = vmatprep.mubr.f32.mxu0 0.0
        %887 = vmatmul.mubr.f32.gmra.mrb[0].mxu0 %v769
        %v888 = vpop.f32.mrb[0].mxu0
        %v889 = vadd.f32 %v728, %v888
        %v890 = vpop.f32.mrb[0].mxu0
        %891 = vmatprep.mubr.f32.mxu0 0.0
        %892 = vmatmul.mubr.f32.gmra.mrb[0].mxu0 %v772
        %v893 = vpop.f32.mrb[0].mxu0
        %v894 = vadd.f32 %v733, %v893
        %v895 = vpop.f32.mrb[0].mxu0
        %896 = vmatprep.mubr.f32.mxu0 0.0
        %897 = vmatmul.mubr.f32.gmra.mrb[0].mxu0 %v775
        %v898 = vpop.f32.mrb[0].mxu0
        %v899 = vadd.f32 %v738, %v898
        %v900 = vpop.f32.mrb[0].mxu0
        %901 = vdwg.mxu0
        %v902 = vld [vmem:[%s5] sm:$0xff]
        %v903 = vld [vmem:[%s5 + $0x8] sm:$0xff]
        %v904 = vld [vmem:[%s5 + $0x10] sm:$0xff]
        %v905 = vld [vmem:[%s5 + $0x18] sm:$0xff]
        %v906 = vld [vmem:[%s5 + $0x20] sm:$0xff]
        %v907 = vld [vmem:[%s5 + $0x28] sm:$0xff]
        %v908 = vld [vmem:[%s5 + $0x30] sm:$0xff]
        %v909 = vld [vmem:[%s5 + $0x38] sm:$0xff]
        %vm910 = vcmask 261120
        %v912 = vsel %vm910, %v902, 0
        %v915 = vsel %vm910, %v903, 0
        %v918 = vsel %vm910, %v904, 0
        %v921 = vsel %vm910, %v905, 0
        %v924 = vsel %vm910, %v906, 0
        %v927 = vsel %vm910, %v907, 0
        %v930 = vsel %vm910, %v908, 0
        %v933 = vsel %vm910, %v909, 0
        %935 = vmatprep.subr.mxu0 0.0
        %936 = vmatpush1.msra.mxu0 %v652
        %937 = vmatprep.subr.mxu0 0.0
        %938 = vmatpush1.msra.mxu0 %v653
        %939 = vmatprep.subr.mxu0 0.0
        %940 = vmatpush1.msra.mxu0 %v654
        %941 = vmatprep.subr.mxu0 0.0
        %942 = vmatpush1.msra.mxu0 %v655
        %943 = vmatprep.subr.mxu0 0.0
        %944 = vmatpush1.msra.mxu0 0.0
        %945 = vmatprep.subr.mxu0 0.0
        %946 = vmatpush1.msra.mxu0 0.0
        %947 = vmatprep.subr.mxu0 0.0
        %948 = vmatpush1.msra.mxu0 0.0
        %949 = vmatprep.subr.mxu0 0.0
        %950 = vmatpush1.msra.mxu0 0.0
        %951 = vmatprep.subr.mxu0 0.0
        %952 = vmatpush1.msra.mxu0 0.0
        %953 = vmatprep.subr.mxu0 0.0
        %954 = vmatpush1.msra.mxu0 0.0
        %955 = vmatprep.subr.mxu0 0.0
        %956 = vmatpush1.msra.mxu0 0.0
        %957 = vmatprep.subr.mxu0 0.0
        %958 = vmatpush1.msra.mxu0 0.0
        %959 = vmatprep.subr.mxu0 0.0
        %960 = vmatpush1.msra.mxu0 0.0
        %961 = vmatprep.subr.mxu0 0.0
        %962 = vmatpush1.msra.mxu0 0.0
        %963 = vmatprep.subr.mxu0 0.0
        %964 = vmatpush1.msra.mxu0 0.0
        %965 = vmatprep.subr.mxu0 0.0
        %966 = vmatpush1.msra.mxu0 0.0
        %967 = vmatprep.subr.mxu0 0.0
        %968 = vmatpush1.msra.mxu0 0.0
        %969 = vmatprep.subr.mxu0 0.0
        %970 = vmatpush1.msra.mxu0 0.0
        %971 = vmatprep.subr.mxu0 0.0
        %972 = vmatpush1.msra.mxu0 0.0
        %973 = vmatprep.subr.mxu0 0.0
        %974 = vmatpush1.msra.mxu0 0.0
        %975 = vmatprep.subr.mxu0 0.0
        %976 = vmatpush1.msra.mxu0 0.0
        %977 = vmatprep.subr.mxu0 0.0
        %978 = vmatpush1.msra.mxu0 0.0
        %979 = vmatprep.subr.mxu0 0.0
        %980 = vmatpush1.msra.mxu0 0.0
        %981 = vmatprep.subr.mxu0 0.0
        %982 = vmatpush1.msra.mxu0 0.0
        %983 = vmatprep.subr.mxu0 0.0
        %984 = vmatpush1.msra.mxu0 0.0
        %985 = vmatprep.subr.mxu0 0.0
        %986 = vmatpush1.msra.mxu0 0.0
        %987 = vmatprep.subr.mxu0 0.0
        %988 = vmatpush1.msra.mxu0 0.0
        %989 = vmatprep.subr.mxu0 0.0
        %990 = vmatpush1.msra.mxu0 0.0
        %991 = vmatprep.subr.mxu0 0.0
        %992 = vmatpush1.msra.mxu0 0.0
        %993 = vmatprep.subr.mxu0 0.0
        %994 = vmatpush1.msra.mxu0 0.0
        %995 = vmatprep.subr.mxu0 0.0
        %996 = vmatpush1.msra.mxu0 0.0
        %997 = vmatprep.subr.mxu0 0.0
        %998 = vmatpush1.msra.mxu0 0.0
        %999 = vmatprep.mubr.f32.mxu0 0.0
        %1000 = vmatmul.mubr.f32.gmra.mrb[0].mxu0 %v912
        %v1001 = vpop.f32.mrb[0].mxu0
        %v1002 = vadd.f32 0.0, %v1001
        %v1003 = vpop.f32.mrb[0].mxu0
        %1004 = vmatprep.mubr.f32.mxu0 0.0
        %1005 = vmatmul.mubr.f32.gmra.mrb[0].mxu0 %v915
        %v1006 = vpop.f32.mrb[0].mxu0
        %v1007 = vadd.f32 0.0, %v1006
        %v1008 = vpop.f32.mrb[0].mxu0
        %1009 = vmatprep.mubr.f32.mxu0 0.0
        %1010 = vmatmul.mubr.f32.gmra.mrb[0].mxu0 %v918
        %v1011 = vpop.f32.mrb[0].mxu0
        %v1012 = vadd.f32 0.0, %v1011
        %v1013 = vpop.f32.mrb[0].mxu0
        %1014 = vmatprep.mubr.f32.mxu0 0.0
        %1015 = vmatmul.mubr.f32.gmra.mrb[0].mxu0 %v921
        %v1016 = vpop.f32.mrb[0].mxu0
        %v1017 = vadd.f32 0.0, %v1016
        %v1018 = vpop.f32.mrb[0].mxu0
        %1019 = vmatprep.mubr.f32.mxu0 0.0
        %1020 = vmatmul.mubr.f32.gmra.mrb[0].mxu0 %v924
        %v1021 = vpop.f32.mrb[0].mxu0
        %v1022 = vadd.f32 0.0, %v1021
        %v1023 = vpop.f32.mrb[0].mxu0
        %1024 = vmatprep.mubr.f32.mxu0 0.0
        %1025 = vmatmul.mubr.f32.gmra.mrb[0].mxu0 %v927
        %v1026 = vpop.f32.mrb[0].mxu0
        %v1027 = vadd.f32 0.0, %v1026
        %v1028 = vpop.f32.mrb[0].mxu0
        %1029 = vmatprep.mubr.f32.mxu0 0.0
        %1030 = vmatmul.mubr.f32.gmra.mrb[0].mxu0 %v930
        %v1031 = vpop.f32.mrb[0].mxu0
        %v1032 = vadd.f32 0.0, %v1031
        %v1033 = vpop.f32.mrb[0].mxu0
        %1034 = vmatprep.mubr.f32.mxu0 0.0
        %1035 = vmatmul.mubr.f32.gmra.mrb[0].mxu0 %v933
        %v1036 = vpop.f32.mrb[0].mxu0
        %v1037 = vadd.f32 0.0, %v1036
        %v1038 = vpop.f32.mrb[0].mxu0
        %1039 = vdwg.mxu0
        %v1040 = vadd.f32 %v844, %v1002
        %v1041 = vadd.f32 %v849, %v1007
        %v1042 = vadd.f32 %v854, %v1012
        %v1043 = vadd.f32 %v859, %v1017
        %v1044 = vxor.u32 %v1040, 2147483648
        %v1045 = vxor.u32 %v1041, 2147483648
        %v1046 = vxor.u32 %v1042, 2147483648
        %v1047 = vxor.u32 %v1043, 2147483648
        %v1048 = vmul.f32 %v1044, 1.442695
        %v1049 = vpow.pop %v1048
        %v1050 = vmul.f32 %v1045, 1.442695
        %v1051 = vpow.pop %v1050
        %v1052 = vmul.f32 %v1046, 1.442695
        %v1053 = vpow.pop %v1052
        %v1054 = vmul.f32 %v1047, 1.442695
        %v1055 = vpow.pop %v1054
        %v1056 = vadd.f32 %v1049, 1.0
        %v1057 = vadd.f32 %v1051, 1.0
        %v1058 = vadd.f32 %v1053, 1.0
        %v1059 = vadd.f32 %v1055, 1.0
        %v1060 = vrcp.pop %v1056
        %v1061 = vmul.f32 1.0, %v1060
        %v1062 = vrcp.pop %v1057
        %v1063 = vmul.f32 1.0, %v1062
        %v1064 = vrcp.pop %v1058
        %v1065 = vmul.f32 1.0, %v1064
        %v1066 = vrcp.pop %v1059
        %v1067 = vmul.f32 1.0, %v1066
        %v1068 = vadd.f32 %v864, %v1022
        %v1069 = vadd.f32 %v869, %v1027
        %v1070 = vadd.f32 %v874, %v1032
        %v1071 = vadd.f32 %v879, %v1037
        %v1072 = vxor.u32 %v1068, 2147483648
        %v1073 = vxor.u32 %v1069, 2147483648
        %v1074 = vxor.u32 %v1070, 2147483648
        %v1075 = vxor.u32 %v1071, 2147483648
        %v1076 = vmul.f32 %v1072, 1.442695
        %v1077 = vpow.pop %v1076
        %v1078 = vmul.f32 %v1073, 1.442695
        %v1079 = vpow.pop %v1078
        %v1080 = vmul.f32 %v1074, 1.442695
        %v1081 = vpow.pop %v1080
        %v1082 = vmul.f32 %v1075, 1.442695
        %v1083 = vpow.pop %v1082
        %v1084 = vadd.f32 %v1077, 1.0
        %v1085 = vadd.f32 %v1079, 1.0
        %v1086 = vadd.f32 %v1081, 1.0
        %v1087 = vadd.f32 %v1083, 1.0
        %v1088 = vrcp.pop %v1084
        %v1089 = vmul.f32 1.0, %v1088
        %v1090 = vrcp.pop %v1085
        %v1091 = vmul.f32 1.0, %v1090
        %v1092 = vrcp.pop %v1086
        %v1093 = vmul.f32 1.0, %v1092
        %v1094 = vrcp.pop %v1087
        %v1095 = vmul.f32 1.0, %v1094
        %v1096 = vld [vmem:[%s6] sm:$0xff]
        %v1097 = vld [vmem:[%s6 + $0x8] sm:$0xff]
        %v1098 = vld [vmem:[%s6 + $0x10] sm:$0xff]
        %v1099 = vld [vmem:[%s6 + $0x18] sm:$0xff]
        %v1100 = vmul.f32 %v1061, %v652
        %v1101 = vmul.f32 %v1063, %v653
        %v1102 = vmul.f32 %v1065, %v654
        %v1103 = vmul.f32 %v1067, %v655
        %v1105 = vsel %vm910, %v1096, 0
        %v1108 = vsel %vm910, %v1097, 0
        %v1111 = vsel %vm910, %v1098, 0
        %v1114 = vsel %vm910, %v1099, 0
        %1116 = vmatprep.subr.mxu0 0.0
        %1117 = vmatpush1.msra.mxu0 %v1100
        %1118 = vmatprep.subr.mxu0 0.0
        %1119 = vmatpush1.msra.mxu0 %v1101
        %1120 = vmatprep.subr.mxu0 0.0
        %1121 = vmatpush1.msra.mxu0 %v1102
        %1122 = vmatprep.subr.mxu0 0.0
        %1123 = vmatpush1.msra.mxu0 %v1103
        %1124 = vmatprep.subr.mxu0 0.0
        %1125 = vmatpush1.msra.mxu0 0.0
        %1126 = vmatprep.subr.mxu0 0.0
        %1127 = vmatpush1.msra.mxu0 0.0
        %1128 = vmatprep.subr.mxu0 0.0
        %1129 = vmatpush1.msra.mxu0 0.0
        %1130 = vmatprep.subr.mxu0 0.0
        %1131 = vmatpush1.msra.mxu0 0.0
        %1132 = vmatprep.subr.mxu0 0.0
        %1133 = vmatpush1.msra.mxu0 0.0
        %1134 = vmatprep.subr.mxu0 0.0
        %1135 = vmatpush1.msra.mxu0 0.0
        %1136 = vmatprep.subr.mxu0 0.0
        %1137 = vmatpush1.msra.mxu0 0.0
        %1138 = vmatprep.subr.mxu0 0.0
        %1139 = vmatpush1.msra.mxu0 0.0
        %1140 = vmatprep.subr.mxu0 0.0
        %1141 = vmatpush1.msra.mxu0 0.0
        %1142 = vmatprep.subr.mxu0 0.0
        %1143 = vmatpush1.msra.mxu0 0.0
        %1144 = vmatprep.subr.mxu0 0.0
        %1145 = vmatpush1.msra.mxu0 0.0
        %1146 = vmatprep.subr.mxu0 0.0
        %1147 = vmatpush1.msra.mxu0 0.0
        %1148 = vmatprep.subr.mxu0 0.0
        %1149 = vmatpush1.msra.mxu0 0.0
        %1150 = vmatprep.subr.mxu0 0.0
        %1151 = vmatpush1.msra.mxu0 0.0
        %1152 = vmatprep.subr.mxu0 0.0
        %1153 = vmatpush1.msra.mxu0 0.0
        %1154 = vmatprep.subr.mxu0 0.0
        %1155 = vmatpush1.msra.mxu0 0.0
        %1156 = vmatprep.subr.mxu0 0.0
        %1157 = vmatpush1.msra.mxu0 0.0
        %1158 = vmatprep.subr.mxu0 0.0
        %1159 = vmatpush1.msra.mxu0 0.0
        %1160 = vmatprep.subr.mxu0 0.0
        %1161 = vmatpush1.msra.mxu0 0.0
        %1162 = vmatprep.subr.mxu0 0.0
        %1163 = vmatpush1.msra.mxu0 0.0
        %1164 = vmatprep.subr.mxu0 0.0
        %1165 = vmatpush1.msra.mxu0 0.0
        %1166 = vmatprep.subr.mxu0 0.0
        %1167 = vmatpush1.msra.mxu0 0.0
        %1168 = vmatprep.subr.mxu0 0.0
        %1169 = vmatpush1.msra.mxu0 0.0
        %1170 = vmatprep.subr.mxu0 0.0
        %1171 = vmatpush1.msra.mxu0 0.0
        %1172 = vmatprep.subr.mxu0 0.0
        %1173 = vmatpush1.msra.mxu0 0.0
        %1174 = vmatprep.subr.mxu0 0.0
        %1175 = vmatpush1.msra.mxu0 0.0
        %1176 = vmatprep.subr.mxu0 0.0
        %1177 = vmatpush1.msra.mxu0 0.0
        %1178 = vmatprep.subr.mxu0 0.0
        %1179 = vmatpush1.msra.mxu0 0.0
        %1180 = vmatprep.mubr.f32.mxu0 0.0
        %1181 = vmatmul.mubr.f32.gmra.mrb[0].mxu0 %v1105
        %v1182 = vpop.f32.mrb[0].mxu0
        %v1183 = vadd.f32 0.0, %v1182
        %v1184 = vpop.f32.mrb[0].mxu0
        %1185 = vmatprep.mubr.f32.mxu0 0.0
        %1186 = vmatmul.mubr.f32.gmra.mrb[0].mxu0 %v1108
        %v1187 = vpop.f32.mrb[0].mxu0
        %v1188 = vadd.f32 0.0, %v1187
        %v1189 = vpop.f32.mrb[0].mxu0
        %1190 = vmatprep.mubr.f32.mxu0 0.0
        %1191 = vmatmul.mubr.f32.gmra.mrb[0].mxu0 %v1111
        %v1192 = vpop.f32.mrb[0].mxu0
        %v1193 = vadd.f32 0.0, %v1192
        %v1194 = vpop.f32.mrb[0].mxu0
        %1195 = vmatprep.mubr.f32.mxu0 0.0
        %1196 = vmatmul.mubr.f32.gmra.mrb[0].mxu0 %v1114
        %v1197 = vpop.f32.mrb[0].mxu0
        %v1198 = vadd.f32 0.0, %v1197
        %v1199 = vpop.f32.mrb[0].mxu0
        %1200 = vdwg.mxu0
        %v1201 = vadd.f32 %v884, %v1183
        %v1202 = vadd.f32 %v889, %v1188
        %v1203 = vadd.f32 %v894, %v1193
        %v1204 = vadd.f32 %v899, %v1198
        %v1205 = vtanh.pop %v1201
        %v1206 = vtanh.pop %v1202
        %v1207 = vtanh.pop %v1203
        %v1208 = vtanh.pop %v1204
        %v1209 = vsub.f32 1.0, %v1089
        %v1210 = vsub.f32 1.0, %v1091
        %v1211 = vsub.f32 1.0, %v1093
        %v1212 = vsub.f32 1.0, %v1095
        %v1213 = vmul.f32 %v1209, %v652
        %v1214 = vmul.f32 %v1210, %v653
        %v1215 = vmul.f32 %v1211, %v654
        %v1216 = vmul.f32 %v1212, %v655
        %v1217 = vmul.f32 %v1089, %v1205
        %v1218 = vmul.f32 %v1091, %v1206
        %v1219 = vmul.f32 %v1093, %v1207
        %v1220 = vmul.f32 %v1095, %v1208
        %v1221 = vadd.f32 %v1213, %v1217
        %v1222 = vadd.f32 %v1214, %v1218
        %v1223 = vadd.f32 %v1215, %v1219
        %v1224 = vadd.f32 %v1216, %v1220
        %1225 = vst [vmem:[%s439] sm:$0xff] %v1221
        %1226 = vst [vmem:[%s439 + $0x8] sm:$0xff] %v1222
        %1227 = vst [vmem:[%s439 + $0x10] sm:$0xff] %v1223
        %1228 = vst [vmem:[%s439 + $0x18] sm:$0xff] %v1224
        %s1229 = sand.u32 %s208, 1
        %s1230 = scalar_lea.sflag [#allocation5], %s1229
        %s1231 = sand.u32 %s208, 1
        %s1232 = smul.addr %s1231, 32
        %s1233 = scalar_lea.vmem [#allocation4], %s1232
        // Predicated region
        $region129: #{tpu_custom_call.1} parent=119 // pred_check
          %p1234 = pneg %p218
        $region130: #{tpu_custom_call.1} parent=119 // pred_check_branch
          %1236 = sbr.rel (%p1234) target = $region132
        $region131: #{tpu_custom_call.1} parent=119 // pred_region
          %s1238 = ssub.s32 512, 512
          %1239 = vsyncadd %s1230, %s1238
          %s1240 = smul.addr %s22, 128
          %s1241 = scalar_lea.hbm %s8, %s1240
          %s1242 = sshll.u32 %s1233, 4
          %s1243 = int_to_ptr.vmem [resolvable:$true] %s1242
          %1248 = dma.vmem_to_hbm [thread:$0]  %s1243, 512, %s1241, %s1230, 128, 256, 8
        $region132: #{tpu_custom_call.1} parent=119 // pred_fallthru
          _
      $region120: #{tpu_custom_call.1} parent=5 // pred_fallthru
        _
      %p1249 = scmp.le.s32.totalorder 2, %s17
      // Predicated region
      $region133: #{tpu_custom_call.1} parent=5 // pred_check
        %p1250 = pneg %p1249
      $region134: #{tpu_custom_call.1} parent=5 // pred_check_branch
        %1252 = sbr.rel (%p1250) target = $region136
      $region135: #{tpu_custom_call.1} parent=5 // pred_region
        %s1253 = ssub.s32 %s17, 2
        // Predicated region
        $region137: #{tpu_custom_call.1} parent=135 // pred_check
          %p1254 = pneg %p224
        $region138: #{tpu_custom_call.1} parent=135 // pred_check_branch
          %1256 = sbr.rel (%p1254) target = $region140
        $region139: #{tpu_custom_call.1} parent=135 // pred_region
          %s1257 = sand.u32 %s209, 1
          %s1258 = scalar_lea.sflag [#allocation5], %s1257
          %s1259 = sand.u32 %s209, 1
          %s1260 = smul.addr %s1259, 32
          %s1261 = scalar_lea.vmem [#allocation4], %s1260
          %1262 = dma.done %s1258, 512
        $region140: #{tpu_custom_call.1} parent=135 // pred_fallthru
          _
      $region136: #{tpu_custom_call.1} parent=5 // pred_fallthru
        _
    $region6: #{tpu_custom_call.1} parent=1 // loop_footer
      %s21 = sadd.s32 1, %s17
    $region7: #{tpu_custom_call.1} parent=1 // loop_footer_branch
      %16 = sbr.rel target = $region3
    $region8: #{tpu_custom_call.1} parent=1 // loop_exit
      _
    %1263 = vsyncpa [#allocation5], 1
    %s1264 = scalar_lea.sflag [#allocation5], 1
    %1265 = vsyncpa %s1264, 1

</llo_original>
